<compile_context>
chip_gen: v6e
topology: v6e:2x2x1
jax: 0.10.0
libtpu: 0.0.40
codegen_flags: <defaults>
</compile_context>

<pallas_src>
import numpy as np
import jax
import jax.numpy as jnp
from jax.experimental import pallas as pl
from jax.experimental.pallas import tpu as pltpu  # noqa: F401  (TPU backend import)


def gru_fused_kernel(x_ref, wx_ref, wh_ref, br_ref, bz_ref, bxn_ref, bhn_ref,
                     out_ref):
    """Whole GRU sequence in one kernel invocation; everything VMEM-resident."""
    S, B, _ = x_ref.shape
    HP = wh_ref.shape[0]          # lane-padded hidden size (multiple of 128)

    wx = wx_ref[...]              # (D, 3*HP)   gate order: r | z | n
    wh = wh_ref[...]              # (HP, 3*HP)
    b_r = br_ref[...]             # (1, HP)  = bxr + bhr (pre-folded)
    b_z = bz_ref[...]             # (1, HP)  = bxz + bhz (pre-folded)
    b_xn = bxn_ref[...]           # (1, HP)
    b_hn = bhn_ref[...]           # (1, HP)

    def step(t, h):
        x_t = x_ref[t]                                                 # (B, D)
        gx = jnp.dot(x_t, wx, preferred_element_type=jnp.float32)      # (B, 3*HP)
        gh = jnp.dot(h, wh, preferred_element_type=jnp.float32)        # (B, 3*HP)
        r = jax.nn.sigmoid(gx[:, 0:HP] + gh[:, 0:HP] + b_r)
        z = jax.nn.sigmoid(gx[:, HP:2 * HP] + gh[:, HP:2 * HP] + b_z)
        n = jnp.tanh(gx[:, 2 * HP:3 * HP] + b_xn
                     + r * (gh[:, 2 * HP:3 * HP] + b_hn))
        return (1.0 - z) * n + z * h

    h0 = jnp.zeros((B, HP), jnp.float32)
    hT = jax.lax.fori_loop(0, S, step, h0, unroll=True)   # S static & small
    out_ref[...] = hT.astype(out_ref.dtype)


def _pack_params(params, H, HP):
    """Fuse + lane-pad GRU weights: Wx (D,3*HP), Wh (HP,3*HP), 4 biases (1,HP)."""
    pad_c = lambda w: jnp.pad(w, ((0, 0), (0, HP - H)))            # pad cols H->HP
    pad_rc = lambda w: jnp.pad(w, ((0, HP - H), (0, HP - H)))      # pad rows+cols

    wx = jnp.concatenate(
        [pad_c(params["wxr"]), pad_c(params["wxz"]), pad_c(params["wxn"])], axis=1)
    wh = jnp.concatenate(
        [pad_rc(params["whr"]), pad_rc(params["whz"]), pad_rc(params["whn"])], axis=1)
    b_r = pad_c(params["bxr"] + params["bhr"])
    b_z = pad_c(params["bxz"] + params["bhz"])
    b_xn = pad_c(params["bxn"])
    b_hn = pad_c(params["bhn"])
    return wx, wh, b_r, b_z, b_xn, b_hn


def question_embedding_forward(x, params):
    """x: (batch, seq, in_dim) float32 -> (batch, num_hid) float32."""
    B, S, D = x.shape
    H = params["whr"].shape[0]
    HP = ((H + 127) // 128) * 128                 # lane-pad hidden dim to 128

    x_tm = jnp.swapaxes(x, 0, 1)                  # (S, B, D) time-major
    wx, wh, b_r, b_z, b_xn, b_hn = _pack_params(params, H, HP)
    operands = (x_tm, wx, wh, b_r, b_z, b_xn, b_hn)

    def full_spec(shape):
        zeros = (0,) * len(shape)
        return pl.BlockSpec(shape, lambda *_: zeros)

    out_padded = pl.pallas_call(
        gru_fused_kernel,
        out_shape=jax.ShapeDtypeStruct((B, HP), jnp.float32),
        in_specs=[full_spec(op.shape) for op in operands],
        out_specs=full_spec((B, HP)),
    )(*operands)

    return out_padded[:, :H]                      # drop lane padding


def gru_reference(x, p):
    """Pure-JAX reference (same math as torch.nn.GRU with h0 = 0)."""
    B, S, D = x.shape
    H = p["whr"].shape[0]

    def step(h, x_t):
        r = jax.nn.sigmoid(x_t @ p["wxr"] + p["bxr"] + h @ p["whr"] + p["bhr"])
        z = jax.nn.sigmoid(x_t @ p["wxz"] + p["bxz"] + h @ p["whz"] + p["bhz"])
        n = jnp.tanh(x_t @ p["wxn"] + p["bxn"] + r * (h @ p["whn"] + p["bhn"]))
        h_new = (1.0 - z) * n + z * h
        return h_new, None

    h0 = jnp.zeros((B, H), jnp.float32)
    hT, _ = jax.lax.scan(step, h0, jnp.swapaxes(x, 0, 1))
    return hT


def make_params(key, in_dim, num_hid):
    """Deterministic synthetic GRU params (PyTorch-style uniform(-1/sqrt(H), 1/sqrt(H)))."""
    k = 1.0 / np.sqrt(num_hid)
    keys = jax.random.split(key, 12)
    names = ["wxr", "wxz", "wxn", "whr", "whz", "whn",
             "bxr", "bxz", "bxn", "bhr", "bhz", "bhn"]
    shapes = [(in_dim, num_hid)] * 3 + [(num_hid, num_hid)] * 3 + [(1, num_hid)] * 6
    return {n: jax.random.uniform(kk, s, jnp.float32, -k, k)
            for n, kk, s in zip(names, keys, shapes)}


if __name__ == "__main__":
    # Module config: in_dim=32, num_hid=32, nlayers=1, bidirect=False, dropout=0.0, GRU
    batch, seq, in_dim, num_hid = 2, 8, 32, 32

    key = jax.random.PRNGKey(0)
    kx, kp = jax.random.split(key)
    x = jax.random.normal(kx, (batch, seq, in_dim), jnp.float32)
    params = make_params(kp, in_dim, num_hid)

    out = question_embedding_forward(x, params)
    out = jax.block_until_ready(out)

    ref = jax.block_until_ready(gru_reference(x, params))
    assert out.shape == (batch, num_hid)
    np.testing.assert_allclose(np.asarray(out), np.asarray(ref), atol=1e-4, rtol=1e-4)

    print("KERNEL_OK")
</pallas_src>

<mosaic_0001>
module attributes {stable_mosaic.version = 11 : i64} {
  func.func @gru_fused_kernel(%arg0: memref<8x2x32xf32, #tpu.memory_space<vmem>>, %arg1: memref<32x384xf32, #tpu.memory_space<vmem>>, %arg2: memref<128x384xf32, #tpu.memory_space<vmem>>, %arg3: memref<1x128xf32, #tpu.memory_space<vmem>>, %arg4: memref<1x128xf32, #tpu.memory_space<vmem>>, %arg5: memref<1x128xf32, #tpu.memory_space<vmem>>, %arg6: memref<1x128xf32, #tpu.memory_space<vmem>>, %arg7: memref<2x128xf32, #tpu.memory_space<vmem>>) attributes {dimension_semantics = [], scalar_prefetch = 0 : i64, scratch_operands = 0 : i64, tpu.core_type = #tpu.core_type<tc>} {
    %c0 = arith.constant 0 : index
    %c0_0 = arith.constant 0 : index
    %0 = vector.load %arg1[%c0, %c0_0] : memref<32x384xf32, #tpu.memory_space<vmem>>, vector<32x384xf32>
    %c0_1 = arith.constant 0 : index
    %c0_2 = arith.constant 0 : index
    %1 = vector.load %arg2[%c0_1, %c0_2] : memref<128x384xf32, #tpu.memory_space<vmem>>, vector<128x384xf32>
    %c0_3 = arith.constant 0 : index
    %c0_4 = arith.constant 0 : index
    %2 = vector.load %arg3[%c0_3, %c0_4] : memref<1x128xf32, #tpu.memory_space<vmem>>, vector<1x128xf32>
    %c0_5 = arith.constant 0 : index
    %c0_6 = arith.constant 0 : index
    %3 = vector.load %arg4[%c0_5, %c0_6] : memref<1x128xf32, #tpu.memory_space<vmem>>, vector<1x128xf32>
    %c0_7 = arith.constant 0 : index
    %c0_8 = arith.constant 0 : index
    %4 = vector.load %arg5[%c0_7, %c0_8] : memref<1x128xf32, #tpu.memory_space<vmem>>, vector<1x128xf32>
    %c0_9 = arith.constant 0 : index
    %c0_10 = arith.constant 0 : index
    %5 = vector.load %arg6[%c0_9, %c0_10] : memref<1x128xf32, #tpu.memory_space<vmem>>, vector<1x128xf32>
    %cst = arith.constant 0.000000e+00 : f32
    %6 = vector.broadcast %cst : f32 to vector<2x128xf32>
    %c0_i32 = arith.constant 0 : i32
    %7 = arith.index_cast %c0_i32 : i32 to index
    %c0_11 = arith.constant 0 : index
    %c0_12 = arith.constant 0 : index
    %8 = vector.load %arg0[%7, %c0_11, %c0_12] : memref<8x2x32xf32, #tpu.memory_space<vmem>>, vector<1x2x32xf32>
    %9 = vector.shape_cast %8 : vector<1x2x32xf32> to vector<2x32xf32>
    %cst_13 = arith.constant dense<0.000000e+00> : vector<2x384xf32>
    %10 = tpu.matmul %9, %0, %cst_13 {dimension_numbers = #tpu.dot_dimension_numbers<[1], [0], [0], [1], [0, 0, 1, 1], [], []>} : vector<2x32xf32>, vector<32x384xf32>, vector<2x384xf32> -> vector<2x384xf32>
    %cst_14 = arith.constant dense<0.000000e+00> : vector<2x384xf32>
    %11 = tpu.matmul %6, %1, %cst_14 {dimension_numbers = #tpu.dot_dimension_numbers<[1], [0], [0], [1], [0, 0, 1, 1], [], []>} : vector<2x128xf32>, vector<128x384xf32>, vector<2x384xf32> -> vector<2x384xf32>
    %12 = vector.extract_strided_slice %10 {offsets = [0, 0], sizes = [2, 128], strides = [1, 1]} : vector<2x384xf32> to vector<2x128xf32>
    %13 = vector.extract_strided_slice %11 {offsets = [0, 0], sizes = [2, 128], strides = [1, 1]} : vector<2x384xf32> to vector<2x128xf32>
    %14 = arith.addf %12, %13 : vector<2x128xf32>
    %15 = vector.broadcast %2 : vector<1x128xf32> to vector<2x128xf32>
    %16 = arith.addf %14, %15 : vector<2x128xf32>
    %17 = arith.negf %16 : vector<2x128xf32>
    %18 = math.exp %17 : vector<2x128xf32>
    %cst_15 = arith.constant 1.000000e+00 : f32
    %19 = vector.broadcast %cst_15 : f32 to vector<2x128xf32>
    %20 = arith.addf %19, %18 : vector<2x128xf32>
    %21 = arith.divf %19, %20 : vector<2x128xf32>
    %22 = vector.extract_strided_slice %10 {offsets = [0, 128], sizes = [2, 128], strides = [1, 1]} : vector<2x384xf32> to vector<2x128xf32>
    %23 = vector.extract_strided_slice %11 {offsets = [0, 128], sizes = [2, 128], strides = [1, 1]} : vector<2x384xf32> to vector<2x128xf32>
    %24 = arith.addf %22, %23 : vector<2x128xf32>
    %25 = vector.broadcast %3 : vector<1x128xf32> to vector<2x128xf32>
    %26 = arith.addf %24, %25 : vector<2x128xf32>
    %27 = arith.negf %26 : vector<2x128xf32>
    %28 = math.exp %27 : vector<2x128xf32>
    %cst_16 = arith.constant 1.000000e+00 : f32
    %29 = vector.broadcast %cst_16 : f32 to vector<2x128xf32>
    %30 = arith.addf %29, %28 : vector<2x128xf32>
    %31 = arith.divf %29, %30 : vector<2x128xf32>
    %32 = vector.extract_strided_slice %10 {offsets = [0, 256], sizes = [2, 128], strides = [1, 1]} : vector<2x384xf32> to vector<2x128xf32>
    %33 = vector.broadcast %4 : vector<1x128xf32> to vector<2x128xf32>
    %34 = arith.addf %32, %33 : vector<2x128xf32>
    %35 = vector.extract_strided_slice %11 {offsets = [0, 256], sizes = [2, 128], strides = [1, 1]} : vector<2x384xf32> to vector<2x128xf32>
    %36 = vector.broadcast %5 : vector<1x128xf32> to vector<2x128xf32>
    %37 = arith.addf %35, %36 : vector<2x128xf32>
    %38 = arith.mulf %21, %37 : vector<2x128xf32>
    %39 = arith.addf %34, %38 : vector<2x128xf32>
    %40 = math.tanh %39 : vector<2x128xf32>
    %cst_17 = arith.constant 1.000000e+00 : f32
    %41 = vector.broadcast %cst_17 : f32 to vector<2x128xf32>
    %42 = arith.subf %41, %31 : vector<2x128xf32>
    %43 = arith.mulf %42, %40 : vector<2x128xf32>
    %44 = arith.mulf %31, %6 : vector<2x128xf32>
    %45 = arith.addf %43, %44 : vector<2x128xf32>
    %c1_i32 = arith.constant 1 : i32
    %46 = arith.index_cast %c1_i32 : i32 to index
    %c0_18 = arith.constant 0 : index
    %c0_19 = arith.constant 0 : index
    %47 = vector.load %arg0[%46, %c0_18, %c0_19] : memref<8x2x32xf32, #tpu.memory_space<vmem>>, vector<1x2x32xf32>
    %48 = vector.shape_cast %47 : vector<1x2x32xf32> to vector<2x32xf32>
    %cst_20 = arith.constant dense<0.000000e+00> : vector<2x384xf32>
    %49 = tpu.matmul %48, %0, %cst_20 {dimension_numbers = #tpu.dot_dimension_numbers<[1], [0], [0], [1], [0, 0, 1, 1], [], []>} : vector<2x32xf32>, vector<32x384xf32>, vector<2x384xf32> -> vector<2x384xf32>
    %cst_21 = arith.constant dense<0.000000e+00> : vector<2x384xf32>
    %50 = tpu.matmul %45, %1, %cst_21 {dimension_numbers = #tpu.dot_dimension_numbers<[1], [0], [0], [1], [0, 0, 1, 1], [], []>} : vector<2x128xf32>, vector<128x384xf32>, vector<2x384xf32> -> vector<2x384xf32>
    %51 = vector.extract_strided_slice %49 {offsets = [0, 0], sizes = [2, 128], strides = [1, 1]} : vector<2x384xf32> to vector<2x128xf32>
    %52 = vector.extract_strided_slice %50 {offsets = [0, 0], sizes = [2, 128], strides = [1, 1]} : vector<2x384xf32> to vector<2x128xf32>
    %53 = arith.addf %51, %52 : vector<2x128xf32>
    %54 = vector.broadcast %2 : vector<1x128xf32> to vector<2x128xf32>
    %55 = arith.addf %53, %54 : vector<2x128xf32>
    %56 = arith.negf %55 : vector<2x128xf32>
    %57 = math.exp %56 : vector<2x128xf32>
    %cst_22 = arith.constant 1.000000e+00 : f32
    %58 = vector.broadcast %cst_22 : f32 to vector<2x128xf32>
    %59 = arith.addf %58, %57 : vector<2x128xf32>
    %60 = arith.divf %58, %59 : vector<2x128xf32>
    %61 = vector.extract_strided_slice %49 {offsets = [0, 128], sizes = [2, 128], strides = [1, 1]} : vector<2x384xf32> to vector<2x128xf32>
    %62 = vector.extract_strided_slice %50 {offsets = [0, 128], sizes = [2, 128], strides = [1, 1]} : vector<2x384xf32> to vector<2x128xf32>
    %63 = arith.addf %61, %62 : vector<2x128xf32>
    %64 = vector.broadcast %3 : vector<1x128xf32> to vector<2x128xf32>
    %65 = arith.addf %63, %64 : vector<2x128xf32>
    %66 = arith.negf %65 : vector<2x128xf32>
    %67 = math.exp %66 : vector<2x128xf32>
    %cst_23 = arith.constant 1.000000e+00 : f32
    %68 = vector.broadcast %cst_23 : f32 to vector<2x128xf32>
    %69 = arith.addf %68, %67 : vector<2x128xf32>
    %70 = arith.divf %68, %69 : vector<2x128xf32>
    %71 = vector.extract_strided_slice %49 {offsets = [0, 256], sizes = [2, 128], strides = [1, 1]} : vector<2x384xf32> to vector<2x128xf32>
    %72 = vector.broadcast %4 : vector<1x128xf32> to vector<2x128xf32>
    %73 = arith.addf %71, %72 : vector<2x128xf32>
    %74 = vector.extract_strided_slice %50 {offsets = [0, 256], sizes = [2, 128], strides = [1, 1]} : vector<2x384xf32> to vector<2x128xf32>
    %75 = vector.broadcast %5 : vector<1x128xf32> to vector<2x128xf32>
    %76 = arith.addf %74, %75 : vector<2x128xf32>
    %77 = arith.mulf %60, %76 : vector<2x128xf32>
    %78 = arith.addf %73, %77 : vector<2x128xf32>
    %79 = math.tanh %78 : vector<2x128xf32>
    %cst_24 = arith.constant 1.000000e+00 : f32
    %80 = vector.broadcast %cst_24 : f32 to vector<2x128xf32>
    %81 = arith.subf %80, %70 : vector<2x128xf32>
    %82 = arith.mulf %81, %79 : vector<2x128xf32>
    %83 = arith.mulf %70, %45 : vector<2x128xf32>
    %84 = arith.addf %82, %83 : vector<2x128xf32>
    %c2_i32 = arith.constant 2 : i32
    %85 = arith.index_cast %c2_i32 : i32 to index
    %c0_25 = arith.constant 0 : index
    %c0_26 = arith.constant 0 : index
    %86 = vector.load %arg0[%85, %c0_25, %c0_26] : memref<8x2x32xf32, #tpu.memory_space<vmem>>, vector<1x2x32xf32>
    %87 = vector.shape_cast %86 : vector<1x2x32xf32> to vector<2x32xf32>
    %cst_27 = arith.constant dense<0.000000e+00> : vector<2x384xf32>
    %88 = tpu.matmul %87, %0, %cst_27 {dimension_numbers = #tpu.dot_dimension_numbers<[1], [0], [0], [1], [0, 0, 1, 1], [], []>} : vector<2x32xf32>, vector<32x384xf32>, vector<2x384xf32> -> vector<2x384xf32>
    %cst_28 = arith.constant dense<0.000000e+00> : vector<2x384xf32>
    %89 = tpu.matmul %84, %1, %cst_28 {dimension_numbers = #tpu.dot_dimension_numbers<[1], [0], [0], [1], [0, 0, 1, 1], [], []>} : vector<2x128xf32>, vector<128x384xf32>, vector<2x384xf32> -> vector<2x384xf32>
    %90 = vector.extract_strided_slice %88 {offsets = [0, 0], sizes = [2, 128], strides = [1, 1]} : vector<2x384xf32> to vector<2x128xf32>
    %91 = vector.extract_strided_slice %89 {offsets = [0, 0], sizes = [2, 128], strides = [1, 1]} : vector<2x384xf32> to vector<2x128xf32>
    %92 = arith.addf %90, %91 : vector<2x128xf32>
    %93 = vector.broadcast %2 : vector<1x128xf32> to vector<2x128xf32>
    %94 = arith.addf %92, %93 : vector<2x128xf32>
    %95 = arith.negf %94 : vector<2x128xf32>
    %96 = math.exp %95 : vector<2x128xf32>
    %cst_29 = arith.constant 1.000000e+00 : f32
    %97 = vector.broadcast %cst_29 : f32 to vector<2x128xf32>
    %98 = arith.addf %97, %96 : vector<2x128xf32>
    %99 = arith.divf %97, %98 : vector<2x128xf32>
    %100 = vector.extract_strided_slice %88 {offsets = [0, 128], sizes = [2, 128], strides = [1, 1]} : vector<2x384xf32> to vector<2x128xf32>
    %101 = vector.extract_strided_slice %89 {offsets = [0, 128], sizes = [2, 128], strides = [1, 1]} : vector<2x384xf32> to vector<2x128xf32>
    %102 = arith.addf %100, %101 : vector<2x128xf32>
    %103 = vector.broadcast %3 : vector<1x128xf32> to vector<2x128xf32>
    %104 = arith.addf %102, %103 : vector<2x128xf32>
    %105 = arith.negf %104 : vector<2x128xf32>
    %106 = math.exp %105 : vector<2x128xf32>
    %cst_30 = arith.constant 1.000000e+00 : f32
    %107 = vector.broadcast %cst_30 : f32 to vector<2x128xf32>
    %108 = arith.addf %107, %106 : vector<2x128xf32>
    %109 = arith.divf %107, %108 : vector<2x128xf32>
    %110 = vector.extract_strided_slice %88 {offsets = [0, 256], sizes = [2, 128], strides = [1, 1]} : vector<2x384xf32> to vector<2x128xf32>
    %111 = vector.broadcast %4 : vector<1x128xf32> to vector<2x128xf32>
    %112 = arith.addf %110, %111 : vector<2x128xf32>
    %113 = vector.extract_strided_slice %89 {offsets = [0, 256], sizes = [2, 128], strides = [1, 1]} : vector<2x384xf32> to vector<2x128xf32>
    %114 = vector.broadcast %5 : vector<1x128xf32> to vector<2x128xf32>
    %115 = arith.addf %113, %114 : vector<2x128xf32>
    %116 = arith.mulf %99, %115 : vector<2x128xf32>
    %117 = arith.addf %112, %116 : vector<2x128xf32>
    %118 = math.tanh %117 : vector<2x128xf32>
    %cst_31 = arith.constant 1.000000e+00 : f32
    %119 = vector.broadcast %cst_31 : f32 to vector<2x128xf32>
    %120 = arith.subf %119, %109 : vector<2x128xf32>
    %121 = arith.mulf %120, %118 : vector<2x128xf32>
    %122 = arith.mulf %109, %84 : vector<2x128xf32>
    %123 = arith.addf %121, %122 : vector<2x128xf32>
    %c3_i32 = arith.constant 3 : i32
    %124 = arith.index_cast %c3_i32 : i32 to index
    %c0_32 = arith.constant 0 : index
    %c0_33 = arith.constant 0 : index
    %125 = vector.load %arg0[%124, %c0_32, %c0_33] : memref<8x2x32xf32, #tpu.memory_space<vmem>>, vector<1x2x32xf32>
    %126 = vector.shape_cast %125 : vector<1x2x32xf32> to vector<2x32xf32>
    %cst_34 = arith.constant dense<0.000000e+00> : vector<2x384xf32>
    %127 = tpu.matmul %126, %0, %cst_34 {dimension_numbers = #tpu.dot_dimension_numbers<[1], [0], [0], [1], [0, 0, 1, 1], [], []>} : vector<2x32xf32>, vector<32x384xf32>, vector<2x384xf32> -> vector<2x384xf32>
    %cst_35 = arith.constant dense<0.000000e+00> : vector<2x384xf32>
    %128 = tpu.matmul %123, %1, %cst_35 {dimension_numbers = #tpu.dot_dimension_numbers<[1], [0], [0], [1], [0, 0, 1, 1], [], []>} : vector<2x128xf32>, vector<128x384xf32>, vector<2x384xf32> -> vector<2x384xf32>
    %129 = vector.extract_strided_slice %127 {offsets = [0, 0], sizes = [2, 128], strides = [1, 1]} : vector<2x384xf32> to vector<2x128xf32>
    %130 = vector.extract_strided_slice %128 {offsets = [0, 0], sizes = [2, 128], strides = [1, 1]} : vector<2x384xf32> to vector<2x128xf32>
    %131 = arith.addf %129, %130 : vector<2x128xf32>
    %132 = vector.broadcast %2 : vector<1x128xf32> to vector<2x128xf32>
    %133 = arith.addf %131, %132 : vector<2x128xf32>
    %134 = arith.negf %133 : vector<2x128xf32>
    %135 = math.exp %134 : vector<2x128xf32>
    %cst_36 = arith.constant 1.000000e+00 : f32
    %136 = vector.broadcast %cst_36 : f32 to vector<2x128xf32>
    %137 = arith.addf %136, %135 : vector<2x128xf32>
    %138 = arith.divf %136, %137 : vector<2x128xf32>
    %139 = vector.extract_strided_slice %127 {offsets = [0, 128], sizes = [2, 128], strides = [1, 1]} : vector<2x384xf32> to vector<2x128xf32>
    %140 = vector.extract_strided_slice %128 {offsets = [0, 128], sizes = [2, 128], strides = [1, 1]} : vector<2x384xf32> to vector<2x128xf32>
    %141 = arith.addf %139, %140 : vector<2x128xf32>
    %142 = vector.broadcast %3 : vector<1x128xf32> to vector<2x128xf32>
    %143 = arith.addf %141, %142 : vector<2x128xf32>
    %144 = arith.negf %143 : vector<2x128xf32>
    %145 = math.exp %144 : vector<2x128xf32>
    %cst_37 = arith.constant 1.000000e+00 : f32
    %146 = vector.broadcast %cst_37 : f32 to vector<2x128xf32>
    %147 = arith.addf %146, %145 : vector<2x128xf32>
    %148 = arith.divf %146, %147 : vector<2x128xf32>
    %149 = vector.extract_strided_slice %127 {offsets = [0, 256], sizes = [2, 128], strides = [1, 1]} : vector<2x384xf32> to vector<2x128xf32>
    %150 = vector.broadcast %4 : vector<1x128xf32> to vector<2x128xf32>
    %151 = arith.addf %149, %150 : vector<2x128xf32>
    %152 = vector.extract_strided_slice %128 {offsets = [0, 256], sizes = [2, 128], strides = [1, 1]} : vector<2x384xf32> to vector<2x128xf32>
    %153 = vector.broadcast %5 : vector<1x128xf32> to vector<2x128xf32>
    %154 = arith.addf %152, %153 : vector<2x128xf32>
    %155 = arith.mulf %138, %154 : vector<2x128xf32>
    %156 = arith.addf %151, %155 : vector<2x128xf32>
    %157 = math.tanh %156 : vector<2x128xf32>
    %cst_38 = arith.constant 1.000000e+00 : f32
    %158 = vector.broadcast %cst_38 : f32 to vector<2x128xf32>
    %159 = arith.subf %158, %148 : vector<2x128xf32>
    %160 = arith.mulf %159, %157 : vector<2x128xf32>
    %161 = arith.mulf %148, %123 : vector<2x128xf32>
    %162 = arith.addf %160, %161 : vector<2x128xf32>
    %c4_i32 = arith.constant 4 : i32
    %163 = arith.index_cast %c4_i32 : i32 to index
    %c0_39 = arith.constant 0 : index
    %c0_40 = arith.constant 0 : index
    %164 = vector.load %arg0[%163, %c0_39, %c0_40] : memref<8x2x32xf32, #tpu.memory_space<vmem>>, vector<1x2x32xf32>
    %165 = vector.shape_cast %164 : vector<1x2x32xf32> to vector<2x32xf32>
    %cst_41 = arith.constant dense<0.000000e+00> : vector<2x384xf32>
    %166 = tpu.matmul %165, %0, %cst_41 {dimension_numbers = #tpu.dot_dimension_numbers<[1], [0], [0], [1], [0, 0, 1, 1], [], []>} : vector<2x32xf32>, vector<32x384xf32>, vector<2x384xf32> -> vector<2x384xf32>
    %cst_42 = arith.constant dense<0.000000e+00> : vector<2x384xf32>
    %167 = tpu.matmul %162, %1, %cst_42 {dimension_numbers = #tpu.dot_dimension_numbers<[1], [0], [0], [1], [0, 0, 1, 1], [], []>} : vector<2x128xf32>, vector<128x384xf32>, vector<2x384xf32> -> vector<2x384xf32>
    %168 = vector.extract_strided_slice %166 {offsets = [0, 0], sizes = [2, 128], strides = [1, 1]} : vector<2x384xf32> to vector<2x128xf32>
    %169 = vector.extract_strided_slice %167 {offsets = [0, 0], sizes = [2, 128], strides = [1, 1]} : vector<2x384xf32> to vector<2x128xf32>
    %170 = arith.addf %168, %169 : vector<2x128xf32>
    %171 = vector.broadcast %2 : vector<1x128xf32> to vector<2x128xf32>
    %172 = arith.addf %170, %171 : vector<2x128xf32>
    %173 = arith.negf %172 : vector<2x128xf32>
    %174 = math.exp %173 : vector<2x128xf32>
    %cst_43 = arith.constant 1.000000e+00 : f32
    %175 = vector.broadcast %cst_43 : f32 to vector<2x128xf32>
    %176 = arith.addf %175, %174 : vector<2x128xf32>
    %177 = arith.divf %175, %176 : vector<2x128xf32>
    %178 = vector.extract_strided_slice %166 {offsets = [0, 128], sizes = [2, 128], strides = [1, 1]} : vector<2x384xf32> to vector<2x128xf32>
    %179 = vector.extract_strided_slice %167 {offsets = [0, 128], sizes = [2, 128], strides = [1, 1]} : vector<2x384xf32> to vector<2x128xf32>
    %180 = arith.addf %178, %179 : vector<2x128xf32>
    %181 = vector.broadcast %3 : vector<1x128xf32> to vector<2x128xf32>
    %182 = arith.addf %180, %181 : vector<2x128xf32>
    %183 = arith.negf %182 : vector<2x128xf32>
    %184 = math.exp %183 : vector<2x128xf32>
    %cst_44 = arith.constant 1.000000e+00 : f32
    %185 = vector.broadcast %cst_44 : f32 to vector<2x128xf32>
    %186 = arith.addf %185, %184 : vector<2x128xf32>
    %187 = arith.divf %185, %186 : vector<2x128xf32>
    %188 = vector.extract_strided_slice %166 {offsets = [0, 256], sizes = [2, 128], strides = [1, 1]} : vector<2x384xf32> to vector<2x128xf32>
    %189 = vector.broadcast %4 : vector<1x128xf32> to vector<2x128xf32>
    %190 = arith.addf %188, %189 : vector<2x128xf32>
    %191 = vector.extract_strided_slice %167 {offsets = [0, 256], sizes = [2, 128], strides = [1, 1]} : vector<2x384xf32> to vector<2x128xf32>
    %192 = vector.broadcast %5 : vector<1x128xf32> to vector<2x128xf32>
    %193 = arith.addf %191, %192 : vector<2x128xf32>
    %194 = arith.mulf %177, %193 : vector<2x128xf32>
    %195 = arith.addf %190, %194 : vector<2x128xf32>
    %196 = math.tanh %195 : vector<2x128xf32>
    %cst_45 = arith.constant 1.000000e+00 : f32
    %197 = vector.broadcast %cst_45 : f32 to vector<2x128xf32>
    %198 = arith.subf %197, %187 : vector<2x128xf32>
    %199 = arith.mulf %198, %196 : vector<2x128xf32>
    %200 = arith.mulf %187, %162 : vector<2x128xf32>
    %201 = arith.addf %199, %200 : vector<2x128xf32>
    %c5_i32 = arith.constant 5 : i32
    %202 = arith.index_cast %c5_i32 : i32 to index
    %c0_46 = arith.constant 0 : index
    %c0_47 = arith.constant 0 : index
    %203 = vector.load %arg0[%202, %c0_46, %c0_47] : memref<8x2x32xf32, #tpu.memory_space<vmem>>, vector<1x2x32xf32>
    %204 = vector.shape_cast %203 : vector<1x2x32xf32> to vector<2x32xf32>
    %cst_48 = arith.constant dense<0.000000e+00> : vector<2x384xf32>
    %205 = tpu.matmul %204, %0, %cst_48 {dimension_numbers = #tpu.dot_dimension_numbers<[1], [0], [0], [1], [0, 0, 1, 1], [], []>} : vector<2x32xf32>, vector<32x384xf32>, vector<2x384xf32> -> vector<2x384xf32>
    %cst_49 = arith.constant dense<0.000000e+00> : vector<2x384xf32>
    %206 = tpu.matmul %201, %1, %cst_49 {dimension_numbers = #tpu.dot_dimension_numbers<[1], [0], [0], [1], [0, 0, 1, 1], [], []>} : vector<2x128xf32>, vector<128x384xf32>, vector<2x384xf32> -> vector<2x384xf32>
    %207 = vector.extract_strided_slice %205 {offsets = [0, 0], sizes = [2, 128], strides = [1, 1]} : vector<2x384xf32> to vector<2x128xf32>
    %208 = vector.extract_strided_slice %206 {offsets = [0, 0], sizes = [2, 128], strides = [1, 1]} : vector<2x384xf32> to vector<2x128xf32>
    %209 = arith.addf %207, %208 : vector<2x128xf32>
    %210 = vector.broadcast %2 : vector<1x128xf32> to vector<2x128xf32>
    %211 = arith.addf %209, %210 : vector<2x128xf32>
    %212 = arith.negf %211 : vector<2x128xf32>
    %213 = math.exp %212 : vector<2x128xf32>
    %cst_50 = arith.constant 1.000000e+00 : f32
    %214 = vector.broadcast %cst_50 : f32 to vector<2x128xf32>
    %215 = arith.addf %214, %213 : vector<2x128xf32>
    %216 = arith.divf %214, %215 : vector<2x128xf32>
    %217 = vector.extract_strided_slice %205 {offsets = [0, 128], sizes = [2, 128], strides = [1, 1]} : vector<2x384xf32> to vector<2x128xf32>
    %218 = vector.extract_strided_slice %206 {offsets = [0, 128], sizes = [2, 128], strides = [1, 1]} : vector<2x384xf32> to vector<2x128xf32>
    %219 = arith.addf %217, %218 : vector<2x128xf32>
    %220 = vector.broadcast %3 : vector<1x128xf32> to vector<2x128xf32>
    %221 = arith.addf %219, %220 : vector<2x128xf32>
    %222 = arith.negf %221 : vector<2x128xf32>
    %223 = math.exp %222 : vector<2x128xf32>
    %cst_51 = arith.constant 1.000000e+00 : f32
    %224 = vector.broadcast %cst_51 : f32 to vector<2x128xf32>
    %225 = arith.addf %224, %223 : vector<2x128xf32>
    %226 = arith.divf %224, %225 : vector<2x128xf32>
    %227 = vector.extract_strided_slice %205 {offsets = [0, 256], sizes = [2, 128], strides = [1, 1]} : vector<2x384xf32> to vector<2x128xf32>
    %228 = vector.broadcast %4 : vector<1x128xf32> to vector<2x128xf32>
    %229 = arith.addf %227, %228 : vector<2x128xf32>
    %230 = vector.extract_strided_slice %206 {offsets = [0, 256], sizes = [2, 128], strides = [1, 1]} : vector<2x384xf32> to vector<2x128xf32>
    %231 = vector.broadcast %5 : vector<1x128xf32> to vector<2x128xf32>
    %232 = arith.addf %230, %231 : vector<2x128xf32>
    %233 = arith.mulf %216, %232 : vector<2x128xf32>
    %234 = arith.addf %229, %233 : vector<2x128xf32>
    %235 = math.tanh %234 : vector<2x128xf32>
    %cst_52 = arith.constant 1.000000e+00 : f32
    %236 = vector.broadcast %cst_52 : f32 to vector<2x128xf32>
    %237 = arith.subf %236, %226 : vector<2x128xf32>
    %238 = arith.mulf %237, %235 : vector<2x128xf32>
    %239 = arith.mulf %226, %201 : vector<2x128xf32>
    %240 = arith.addf %238, %239 : vector<2x128xf32>
    %c6_i32 = arith.constant 6 : i32
    %241 = arith.index_cast %c6_i32 : i32 to index
    %c0_53 = arith.constant 0 : index
    %c0_54 = arith.constant 0 : index
    %242 = vector.load %arg0[%241, %c0_53, %c0_54] : memref<8x2x32xf32, #tpu.memory_space<vmem>>, vector<1x2x32xf32>
    %243 = vector.shape_cast %242 : vector<1x2x32xf32> to vector<2x32xf32>
    %cst_55 = arith.constant dense<0.000000e+00> : vector<2x384xf32>
    %244 = tpu.matmul %243, %0, %cst_55 {dimension_numbers = #tpu.dot_dimension_numbers<[1], [0], [0], [1], [0, 0, 1, 1], [], []>} : vector<2x32xf32>, vector<32x384xf32>, vector<2x384xf32> -> vector<2x384xf32>
    %cst_56 = arith.constant dense<0.000000e+00> : vector<2x384xf32>
    %245 = tpu.matmul %240, %1, %cst_56 {dimension_numbers = #tpu.dot_dimension_numbers<[1], [0], [0], [1], [0, 0, 1, 1], [], []>} : vector<2x128xf32>, vector<128x384xf32>, vector<2x384xf32> -> vector<2x384xf32>
    %246 = vector.extract_strided_slice %244 {offsets = [0, 0], sizes = [2, 128], strides = [1, 1]} : vector<2x384xf32> to vector<2x128xf32>
    %247 = vector.extract_strided_slice %245 {offsets = [0, 0], sizes = [2, 128], strides = [1, 1]} : vector<2x384xf32> to vector<2x128xf32>
    %248 = arith.addf %246, %247 : vector<2x128xf32>
    %249 = vector.broadcast %2 : vector<1x128xf32> to vector<2x128xf32>
    %250 = arith.addf %248, %249 : vector<2x128xf32>
    %251 = arith.negf %250 : vector<2x128xf32>
    %252 = math.exp %251 : vector<2x128xf32>
    %cst_57 = arith.constant 1.000000e+00 : f32
    %253 = vector.broadcast %cst_57 : f32 to vector<2x128xf32>
    %254 = arith.addf %253, %252 : vector<2x128xf32>
    %255 = arith.divf %253, %254 : vector<2x128xf32>
    %256 = vector.extract_strided_slice %244 {offsets = [0, 128], sizes = [2, 128], strides = [1, 1]} : vector<2x384xf32> to vector<2x128xf32>
    %257 = vector.extract_strided_slice %245 {offsets = [0, 128], sizes = [2, 128], strides = [1, 1]} : vector<2x384xf32> to vector<2x128xf32>
    %258 = arith.addf %256, %257 : vector<2x128xf32>
    %259 = vector.broadcast %3 : vector<1x128xf32> to vector<2x128xf32>
    %260 = arith.addf %258, %259 : vector<2x128xf32>
    %261 = arith.negf %260 : vector<2x128xf32>
    %262 = math.exp %261 : vector<2x128xf32>
    %cst_58 = arith.constant 1.000000e+00 : f32
    %263 = vector.broadcast %cst_58 : f32 to vector<2x128xf32>
    %264 = arith.addf %263, %262 : vector<2x128xf32>
    %265 = arith.divf %263, %264 : vector<2x128xf32>
    %266 = vector.extract_strided_slice %244 {offsets = [0, 256], sizes = [2, 128], strides = [1, 1]} : vector<2x384xf32> to vector<2x128xf32>
    %267 = vector.broadcast %4 : vector<1x128xf32> to vector<2x128xf32>
    %268 = arith.addf %266, %267 : vector<2x128xf32>
    %269 = vector.extract_strided_slice %245 {offsets = [0, 256], sizes = [2, 128], strides = [1, 1]} : vector<2x384xf32> to vector<2x128xf32>
    %270 = vector.broadcast %5 : vector<1x128xf32> to vector<2x128xf32>
    %271 = arith.addf %269, %270 : vector<2x128xf32>
    %272 = arith.mulf %255, %271 : vector<2x128xf32>
    %273 = arith.addf %268, %272 : vector<2x128xf32>
    %274 = math.tanh %273 : vector<2x128xf32>
    %cst_59 = arith.constant 1.000000e+00 : f32
    %275 = vector.broadcast %cst_59 : f32 to vector<2x128xf32>
    %276 = arith.subf %275, %265 : vector<2x128xf32>
    %277 = arith.mulf %276, %274 : vector<2x128xf32>
    %278 = arith.mulf %265, %240 : vector<2x128xf32>
    %279 = arith.addf %277, %278 : vector<2x128xf32>
    %c7_i32 = arith.constant 7 : i32
    %280 = arith.index_cast %c7_i32 : i32 to index
    %c0_60 = arith.constant 0 : index
    %c0_61 = arith.constant 0 : index
    %281 = vector.load %arg0[%280, %c0_60, %c0_61] : memref<8x2x32xf32, #tpu.memory_space<vmem>>, vector<1x2x32xf32>
    %282 = vector.shape_cast %281 : vector<1x2x32xf32> to vector<2x32xf32>
    %cst_62 = arith.constant dense<0.000000e+00> : vector<2x384xf32>
    %283 = tpu.matmul %282, %0, %cst_62 {dimension_numbers = #tpu.dot_dimension_numbers<[1], [0], [0], [1], [0, 0, 1, 1], [], []>} : vector<2x32xf32>, vector<32x384xf32>, vector<2x384xf32> -> vector<2x384xf32>
    %cst_63 = arith.constant dense<0.000000e+00> : vector<2x384xf32>
    %284 = tpu.matmul %279, %1, %cst_63 {dimension_numbers = #tpu.dot_dimension_numbers<[1], [0], [0], [1], [0, 0, 1, 1], [], []>} : vector<2x128xf32>, vector<128x384xf32>, vector<2x384xf32> -> vector<2x384xf32>
    %285 = vector.extract_strided_slice %283 {offsets = [0, 0], sizes = [2, 128], strides = [1, 1]} : vector<2x384xf32> to vector<2x128xf32>
    %286 = vector.extract_strided_slice %284 {offsets = [0, 0], sizes = [2, 128], strides = [1, 1]} : vector<2x384xf32> to vector<2x128xf32>
    %287 = arith.addf %285, %286 : vector<2x128xf32>
    %288 = vector.broadcast %2 : vector<1x128xf32> to vector<2x128xf32>
    %289 = arith.addf %287, %288 : vector<2x128xf32>
    %290 = arith.negf %289 : vector<2x128xf32>
    %291 = math.exp %290 : vector<2x128xf32>
    %cst_64 = arith.constant 1.000000e+00 : f32
    %292 = vector.broadcast %cst_64 : f32 to vector<2x128xf32>
    %293 = arith.addf %292, %291 : vector<2x128xf32>
    %294 = arith.divf %292, %293 : vector<2x128xf32>
    %295 = vector.extract_strided_slice %283 {offsets = [0, 128], sizes = [2, 128], strides = [1, 1]} : vector<2x384xf32> to vector<2x128xf32>
    %296 = vector.extract_strided_slice %284 {offsets = [0, 128], sizes = [2, 128], strides = [1, 1]} : vector<2x384xf32> to vector<2x128xf32>
    %297 = arith.addf %295, %296 : vector<2x128xf32>
    %298 = vector.broadcast %3 : vector<1x128xf32> to vector<2x128xf32>
    %299 = arith.addf %297, %298 : vector<2x128xf32>
    %300 = arith.negf %299 : vector<2x128xf32>
    %301 = math.exp %300 : vector<2x128xf32>
    %cst_65 = arith.constant 1.000000e+00 : f32
    %302 = vector.broadcast %cst_65 : f32 to vector<2x128xf32>
    %303 = arith.addf %302, %301 : vector<2x128xf32>
    %304 = arith.divf %302, %303 : vector<2x128xf32>
    %305 = vector.extract_strided_slice %283 {offsets = [0, 256], sizes = [2, 128], strides = [1, 1]} : vector<2x384xf32> to vector<2x128xf32>
    %306 = vector.broadcast %4 : vector<1x128xf32> to vector<2x128xf32>
    %307 = arith.addf %305, %306 : vector<2x128xf32>
    %308 = vector.extract_strided_slice %284 {offsets = [0, 256], sizes = [2, 128], strides = [1, 1]} : vector<2x384xf32> to vector<2x128xf32>
    %309 = vector.broadcast %5 : vector<1x128xf32> to vector<2x128xf32>
    %310 = arith.addf %308, %309 : vector<2x128xf32>
    %311 = arith.mulf %294, %310 : vector<2x128xf32>
    %312 = arith.addf %307, %311 : vector<2x128xf32>
    %313 = math.tanh %312 : vector<2x128xf32>
    %cst_66 = arith.constant 1.000000e+00 : f32
    %314 = vector.broadcast %cst_66 : f32 to vector<2x128xf32>
    %315 = arith.subf %314, %304 : vector<2x128xf32>
    %316 = arith.mulf %315, %313 : vector<2x128xf32>
    %317 = arith.mulf %304, %279 : vector<2x128xf32>
    %318 = arith.addf %316, %317 : vector<2x128xf32>
    %c8_i32 = arith.constant 8 : i32
    %c0_67 = arith.constant 0 : index
    %c0_68 = arith.constant 0 : index
    %319 = vector.load %arg7[%c0_67, %c0_68] : memref<2x128xf32, #tpu.memory_space<vmem>>, vector<2x128xf32>
    tpu.vector_store %arg7[%c0_67, %c0_68], %318 {strides = array<i32>} : memref<2x128xf32, #tpu.memory_space<vmem>>, vector<2x128xf32>,
    return
  }
}

</mosaic_0001>

<llo_original>
// kernel: tpu_custom_call.1
$region0: #{tpu_custom_call.1}
  #allocation0 [shape = 'u32[]', space=smem, size = 0x4, offset = 0x4, fixed_abs, tag = 'smem constant byte address 0x4 - core index']
  #allocation1 [shape = 'u32[144,128]{1,0:T(1,128)}', space=vmem, size = 0x12000, scoped, tag = 'internal scratch']
  %s0 = inlined_call_operand.hbm [shape: f32[8,2,32], index: 0, kind: input, shape index: {}]
  %s1 = inlined_call_operand.hbm [shape: f32[32,384], index: 1, kind: input, shape index: {}]
  %s2 = inlined_call_operand.hbm [shape: f32[128,384], index: 2, kind: input, shape index: {}]
  %s3 = inlined_call_operand.vmem [shape: f32[1,128], index: 3, kind: input, shape index: {}]
  %s4 = inlined_call_operand.vmem [shape: f32[1,128], index: 4, kind: input, shape index: {}]
  %s5 = inlined_call_operand.vmem [shape: f32[1,128], index: 5, kind: input, shape index: {}]
  %s6 = inlined_call_operand.vmem [shape: f32[1,128], index: 6, kind: input, shape index: {}]
  %s7 = inlined_call_operand.hbm [shape: f32[2,128], index: 7, kind: output, shape index: {}]
  %s8 = sld [smem:[#allocation0]]
  $region50: #{tpu_custom_call.1} parent=0
    _
  %s10 = ssub.s32 1, %s8
  %s11 = scalar_select 0, %s10, %s8
  $region1: #{tpu_custom_call.1} parent=0
    #allocation2 [shape = 'u8[8192]{0}', space=vmem, size = 0x2000, scoped, tag = 'input window, operand 0, single buffered']
    #allocation3 [shape = 's32[1]{0}', space=sflag, size = 0x4, scoped, tag = 'scoped memory for tpu_custom_call.1']
    #allocation4 [shape = 's32[1]{0}', space=sflag, size = 0x4, scoped, tag = 'scoped memory for tpu_custom_call.1']
    #allocation5 [shape = 'u8[49152]{0}', space=vmem, size = 0xc000, scoped, tag = 'input window, operand 1, single buffered']
    #allocation6 [shape = 's32[1]{0}', space=sflag, size = 0x4, scoped, tag = 'scoped memory for tpu_custom_call.1']
    #allocation7 [shape = 'u8[196608]{0}', space=vmem, size = 0x30000, scoped, tag = 'input window, operand 2, single buffered']
    #allocation8 [shape = 'u8[1024]{0}', space=vmem, size = 0x400, scoped, tag = 'output window, operand 0, single buffered']
    %12 = vsyncpa [#allocation3], 0
    %13 = vsyncpa [#allocation6], 0
    %14 = vsyncpa [#allocation4], 0
    // Predicated region
    $region2: #{tpu_custom_call.1} parent=1 // pred_check
      _
    $region3: #{tpu_custom_call.1} parent=1 // pred_check_branch
      %16 = sbr.rel (0) target = $region5
    $region4: #{tpu_custom_call.1} parent=1 // pred_region
      %s18 = ssub.s32 256, 256
      %19 = vsyncadd [#allocation3], %s18
      %s20 = sshll.u32 [#allocation2], 4
      %s21 = int_to_ptr.vmem [resolvable:$true] %s20
      %26 = dma.hbm_to_vmem [thread:$0]  %s0, 256, %s21, [#allocation3], 32, 32, 2
    $region5: #{tpu_custom_call.1} parent=1 // pred_fallthru
      _
    // Predicated region
    $region6: #{tpu_custom_call.1} parent=1 // pred_check
      _
    $region7: #{tpu_custom_call.1} parent=1 // pred_check_branch
      %28 = sbr.rel (0) target = $region9
    $region8: #{tpu_custom_call.1} parent=1 // pred_region
      %s30 = ssub.s32 1536, 1536
      %31 = vsyncadd [#allocation6], %s30
      %s32 = sshll.u32 [#allocation5], 4
      %s33 = int_to_ptr.vmem [resolvable:$true] %s32
      %38 = dma.hbm_to_vmem [thread:$0]  %s1, 1536, %s33, [#allocation6], 384, 384, 24
    $region9: #{tpu_custom_call.1} parent=1 // pred_fallthru
      _
    // Predicated region
    $region10: #{tpu_custom_call.1} parent=1 // pred_check
      _
    $region11: #{tpu_custom_call.1} parent=1 // pred_check_branch
      %40 = sbr.rel (0) target = $region13
    $region12: #{tpu_custom_call.1} parent=1 // pred_region
      %s42 = ssub.s32 6144, 6144
      %43 = vsyncadd [#allocation6], %s42
      %s44 = sshll.u32 [#allocation7], 4
      %s45 = int_to_ptr.vmem [resolvable:$true] %s44
      %50 = dma.hbm_to_vmem [thread:$0]  %s2, 6144, %s45, [#allocation6], 384, 384, 24
    $region13: #{tpu_custom_call.1} parent=1 // pred_fallthru
      _
    // Predicated region
    $region14: #{tpu_custom_call.1} parent=1 // pred_check
      _
    $region15: #{tpu_custom_call.1} parent=1 // pred_check_branch
      %52 = sbr.rel (0) target = $region17
    $region16: #{tpu_custom_call.1} parent=1 // pred_region
      _
    $region17: #{tpu_custom_call.1} parent=1 // pred_fallthru
      _
    // Predicated region
    $region18: #{tpu_custom_call.1} parent=1 // pred_check
      _
    $region19: #{tpu_custom_call.1} parent=1 // pred_check_branch
      %54 = sbr.rel (0) target = $region21
    $region20: #{tpu_custom_call.1} parent=1 // pred_region
      _
    $region21: #{tpu_custom_call.1} parent=1 // pred_fallthru
      _
    // Predicated region
    $region22: #{tpu_custom_call.1} parent=1 // pred_check
      _
    $region23: #{tpu_custom_call.1} parent=1 // pred_check_branch
      %56 = sbr.rel (0) target = $region25
    $region24: #{tpu_custom_call.1} parent=1 // pred_region
      _
    $region25: #{tpu_custom_call.1} parent=1 // pred_fallthru
      _
    // Predicated region
    $region26: #{tpu_custom_call.1} parent=1 // pred_check
      _
    $region27: #{tpu_custom_call.1} parent=1 // pred_check_branch
      %58 = sbr.rel (0) target = $region29
    $region28: #{tpu_custom_call.1} parent=1 // pred_region
      _
    $region29: #{tpu_custom_call.1} parent=1 // pred_fallthru
      _
    // Predicated region
    $region30: #{tpu_custom_call.1} parent=1 // pred_check
      _
    $region31: #{tpu_custom_call.1} parent=1 // pred_check_branch
      %60 = sbr.rel (0) target = $region33
    $region32: #{tpu_custom_call.1} parent=1 // pred_region
      %61 = dma.done [#allocation3], 256
    $region33: #{tpu_custom_call.1} parent=1 // pred_fallthru
      _
    // Predicated region
    $region34: #{tpu_custom_call.1} parent=1 // pred_check
      _
    $region35: #{tpu_custom_call.1} parent=1 // pred_check_branch
      %63 = sbr.rel (0) target = $region37
    $region36: #{tpu_custom_call.1} parent=1 // pred_region
      %64 = dma.done [#allocation6], 1536
    $region37: #{tpu_custom_call.1} parent=1 // pred_fallthru
      _
    // Predicated region
    $region38: #{tpu_custom_call.1} parent=1 // pred_check
      _
    $region39: #{tpu_custom_call.1} parent=1 // pred_check_branch
      %66 = sbr.rel (0) target = $region41
    $region40: #{tpu_custom_call.1} parent=1 // pred_region
      %67 = dma.done [#allocation6], 6144
    $region41: #{tpu_custom_call.1} parent=1 // pred_fallthru
      _
    %v68 = vld [vmem:[#allocation5] sm:$0xff]
    %v69 = vld [vmem:[#allocation5 + $0x8] sm:$0xff]
    %v70 = vld [vmem:[#allocation5 + $0x10] sm:$0xff]
    %v71 = vld [vmem:[#allocation5 + $0x18] sm:$0xff]
    %v72 = vld [vmem:[#allocation5 + $0x20] sm:$0xff]
    %v73 = vld [vmem:[#allocation5 + $0x28] sm:$0xff]
    %v74 = vld [vmem:[#allocation5 + $0x30] sm:$0xff]
    %v75 = vld [vmem:[#allocation5 + $0x38] sm:$0xff]
    %v76 = vld [vmem:[#allocation5 + $0x40] sm:$0xff]
    %v77 = vld [vmem:[#allocation5 + $0x48] sm:$0xff]
    %v78 = vld [vmem:[#allocation5 + $0x50] sm:$0xff]
    %v79 = vld [vmem:[#allocation5 + $0x58] sm:$0xff]
    %v80 = vld [vmem:[#allocation7] sm:$0xff]
    %v81 = vld [vmem:[#allocation7 + $0x8] sm:$0xff]
    %v82 = vld [vmem:[#allocation7 + $0x10] sm:$0xff]
    %v83 = vld [vmem:[#allocation7 + $0x18] sm:$0xff]
    %v84 = vld [vmem:[#allocation7 + $0x20] sm:$0xff]
    %v85 = vld [vmem:[#allocation7 + $0x28] sm:$0xff]
    %v86 = vld [vmem:[#allocation7 + $0x30] sm:$0xff]
    %v87 = vld [vmem:[#allocation7 + $0x38] sm:$0xff]
    %v88 = vld [vmem:[#allocation7 + $0x40] sm:$0xff]
    %v89 = vld [vmem:[#allocation7 + $0x48] sm:$0xff]
    %v90 = vld [vmem:[#allocation7 + $0x50] sm:$0xff]
    %v91 = vld [vmem:[#allocation7 + $0x58] sm:$0xff]
    %v92 = vld [vmem:[#allocation7 + $0x60] sm:$0xff]
    %v93 = vld [vmem:[#allocation7 + $0x68] sm:$0xff]
    %v94 = vld [vmem:[#allocation7 + $0x70] sm:$0xff]
    %v95 = vld [vmem:[#allocation7 + $0x78] sm:$0xff]
    %v96 = vld [vmem:[#allocation7 + $0x80] sm:$0xff]
    %v97 = vld [vmem:[#allocation7 + $0x88] sm:$0xff]
    %v98 = vld [vmem:[#allocation7 + $0x90] sm:$0xff]
    %v99 = vld [vmem:[#allocation7 + $0x98] sm:$0xff]
    %v100 = vld [vmem:[#allocation7 + $0xa0] sm:$0xff]
    %v101 = vld [vmem:[#allocation7 + $0xa8] sm:$0xff]
    %v102 = vld [vmem:[#allocation7 + $0xb0] sm:$0xff]
    %v103 = vld [vmem:[#allocation7 + $0xb8] sm:$0xff]
    %v104 = vld [vmem:[#allocation7 + $0xc0] sm:$0xff]
    %v105 = vld [vmem:[#allocation7 + $0xc8] sm:$0xff]
    %v106 = vld [vmem:[#allocation7 + $0xd0] sm:$0xff]
    %v107 = vld [vmem:[#allocation7 + $0xd8] sm:$0xff]
    %v108 = vld [vmem:[#allocation7 + $0xe0] sm:$0xff]
    %v109 = vld [vmem:[#allocation7 + $0xe8] sm:$0xff]
    %v110 = vld [vmem:[#allocation7 + $0xf0] sm:$0xff]
    %v111 = vld [vmem:[#allocation7 + $0xf8] sm:$0xff]
    %v112 = vld [vmem:[#allocation7 + $0x100] sm:$0xff]
    %v113 = vld [vmem:[#allocation7 + $0x108] sm:$0xff]
    %v114 = vld [vmem:[#allocation7 + $0x110] sm:$0xff]
    %v115 = vld [vmem:[#allocation7 + $0x118] sm:$0xff]
    %v116 = vld [vmem:[#allocation7 + $0x120] sm:$0xff]
    %v117 = vld [vmem:[#allocation7 + $0x128] sm:$0xff]
    %v118 = vld [vmem:[#allocation7 + $0x130] sm:$0xff]
    %v119 = vld [vmem:[#allocation7 + $0x138] sm:$0xff]
    %v120 = vld [vmem:[#allocation7 + $0x140] sm:$0xff]
    %v121 = vld [vmem:[#allocation7 + $0x148] sm:$0xff]
    %v122 = vld [vmem:[#allocation7 + $0x150] sm:$0xff]
    %v123 = vld [vmem:[#allocation7 + $0x158] sm:$0xff]
    %v124 = vld [vmem:[#allocation7 + $0x160] sm:$0xff]
    %v125 = vld [vmem:[#allocation7 + $0x168] sm:$0xff]
    %v126 = vld [vmem:[#allocation7 + $0x170] sm:$0xff]
    %v127 = vld [vmem:[#allocation7 + $0x178] sm:$0xff]
    %v128 = vld [vmem:[%s3] sm:$0x1]
    %v129 = vld [vmem:[%s4] sm:$0x1]
    %v130 = vld [vmem:[%s5] sm:$0x1]
    %v131 = vld [vmem:[%s6] sm:$0x1]
    %v132 = vld [vmem:[#allocation2] sm:$0x3]
    %vm133 = vcmask 261120
    %v135 = vsel %vm133, %v132, 0
    %137 = vmatprep.subr.mxu0 0.0
    %138 = vmatpush1.msra.mxu0 0.0
    %139 = vmatprep.subr.mxu0 0.0
    %140 = vmatpush1.msra.mxu0 0.0
    %141 = vmatprep.subr.mxu0 0.0
    %142 = vmatpush1.msra.mxu0 0.0
    %143 = vmatprep.subr.mxu0 0.0
    %144 = vmatpush1.msra.mxu0 0.0
    %145 = vmatprep.subr.mxu0 0.0
    %146 = vmatpush1.msra.mxu0 0.0
    %147 = vmatprep.subr.mxu0 0.0
    %148 = vmatpush1.msra.mxu0 0.0
    %149 = vmatprep.subr.mxu0 0.0
    %150 = vmatpush1.msra.mxu0 0.0
    %151 = vmatprep.subr.mxu0 0.0
    %152 = vmatpush1.msra.mxu0 0.0
    %153 = vmatprep.subr.mxu0 0.0
    %154 = vmatpush1.msra.mxu0 0.0
    %155 = vmatprep.subr.mxu0 0.0
    %156 = vmatpush1.msra.mxu0 0.0
    %157 = vmatprep.subr.mxu0 0.0
    %158 = vmatpush1.msra.mxu0 0.0
    %159 = vmatprep.subr.mxu0 0.0
    %160 = vmatpush1.msra.mxu0 0.0
    %161 = vmatprep.subr.mxu0 %v78
    %162 = vmatpush1.msra.mxu0 %v77
    %163 = vmatprep.subr.mxu0 %v75
    %164 = vmatpush1.msra.mxu0 %v74
    %165 = vmatprep.subr.mxu0 %v72
    %166 = vmatpush1.msra.mxu0 %v71
    %167 = vmatprep.subr.mxu0 %v69
    %168 = vmatpush1.msra.mxu0 %v68
    %169 = vmatprep.subr.mxu0 0.0
    %170 = vmatpush2.msra.mxu0 0.0
    %171 = vmatprep.subr.mxu0 0.0
    %172 = vmatpush2.msra.mxu0 0.0
    %173 = vmatprep.subr.mxu0 0.0
    %174 = vmatpush2.msra.mxu0 0.0
    %175 = vmatprep.subr.mxu0 0.0
    %176 = vmatpush2.msra.mxu0 0.0
    %177 = vmatprep.subr.mxu0 0.0
    %178 = vmatpush2.msra.mxu0 0.0
    %179 = vmatprep.subr.mxu0 0.0
    %180 = vmatpush2.msra.mxu0 0.0
    %181 = vmatprep.subr.mxu0 0.0
    %182 = vmatpush2.msra.mxu0 0.0
    %183 = vmatprep.subr.mxu0 0.0
    %184 = vmatpush2.msra.mxu0 0.0
    %185 = vmatprep.subr.mxu0 0.0
    %186 = vmatpush2.msra.mxu0 0.0
    %187 = vmatprep.subr.mxu0 0.0
    %188 = vmatpush2.msra.mxu0 0.0
    %189 = vmatprep.subr.mxu0 0.0
    %190 = vmatpush2.msra.mxu0 0.0
    %191 = vmatprep.subr.mxu0 0.0
    %192 = vmatpush2.msra.mxu0 0.0
    %193 = vmatprep.subr.mxu0 0.0
    %194 = vmatpush2.msra.mxu0 0.0
    %195 = vmatprep.subr.mxu0 0.0
    %196 = vmatpush2.msra.mxu0 0.0
    %197 = vmatprep.subr.mxu0 0.0
    %198 = vmatpush2.msra.mxu0 0.0
    %199 = vmatprep.subr.mxu0 0.0
    %200 = vmatpush2.msra.mxu0 0.0
    %201 = vmatprep.mubr.f32.mxu0 0.0
    %202 = vmatmul.mubr.f32.gmra.mxu0 %v135
    %v203 = vpop.f32.mrf.mxu0
    %v204 = vadd.f32 0.0, %v203
    %v205 = vpop.f32.mrf.mxu0
    %v206 = vadd.f32 0.0, %v205
    %207 = vdwg.mxu0
    %208 = vmatprep.subr.mxu0 0.0
    %209 = vmatpush1.msra.mxu0 0.0
    %210 = vmatprep.subr.mxu0 0.0
    %211 = vmatpush1.msra.mxu0 0.0
    %212 = vmatprep.subr.mxu0 0.0
    %213 = vmatpush1.msra.mxu0 0.0
    %214 = vmatprep.subr.mxu0 0.0
    %215 = vmatpush1.msra.mxu0 0.0
    %216 = vmatprep.subr.mxu0 0.0
    %217 = vmatpush1.msra.mxu0 0.0
    %218 = vmatprep.subr.mxu0 0.0
    %219 = vmatpush1.msra.mxu0 0.0
    %220 = vmatprep.subr.mxu0 0.0
    %221 = vmatpush1.msra.mxu0 0.0
    %222 = vmatprep.subr.mxu0 0.0
    %223 = vmatpush1.msra.mxu0 0.0
    %224 = vmatprep.subr.mxu0 0.0
    %225 = vmatpush1.msra.mxu0 0.0
    %226 = vmatprep.subr.mxu0 0.0
    %227 = vmatpush1.msra.mxu0 0.0
    %228 = vmatprep.subr.mxu0 0.0
    %229 = vmatpush1.msra.mxu0 0.0
    %230 = vmatprep.subr.mxu0 0.0
    %231 = vmatpush1.msra.mxu0 0.0
    %232 = vmatprep.subr.mxu0 0.0
    %233 = vmatpush1.msra.mxu0 %v79
    %234 = vmatprep.subr.mxu0 0.0
    %235 = vmatpush1.msra.mxu0 %v76
    %236 = vmatprep.subr.mxu0 0.0
    %237 = vmatpush1.msra.mxu0 %v73
    %238 = vmatprep.subr.mxu0 0.0
    %239 = vmatpush1.msra.mxu0 %v70
    %240 = vmatprep.subr.mxu0 0.0
    %241 = vmatpush2.msra.mxu0 0.0
    %242 = vmatprep.subr.mxu0 0.0
    %243 = vmatpush2.msra.mxu0 0.0
    %244 = vmatprep.subr.mxu0 0.0
    %245 = vmatpush2.msra.mxu0 0.0
    %246 = vmatprep.subr.mxu0 0.0
    %247 = vmatpush2.msra.mxu0 0.0
    %248 = vmatprep.subr.mxu0 0.0
    %249 = vmatpush2.msra.mxu0 0.0
    %250 = vmatprep.subr.mxu0 0.0
    %251 = vmatpush2.msra.mxu0 0.0
    %252 = vmatprep.subr.mxu0 0.0
    %253 = vmatpush2.msra.mxu0 0.0
    %254 = vmatprep.subr.mxu0 0.0
    %255 = vmatpush2.msra.mxu0 0.0
    %256 = vmatprep.subr.mxu0 0.0
    %257 = vmatpush2.msra.mxu0 0.0
    %258 = vmatprep.subr.mxu0 0.0
    %259 = vmatpush2.msra.mxu0 0.0
    %260 = vmatprep.subr.mxu0 0.0
    %261 = vmatpush2.msra.mxu0 0.0
    %262 = vmatprep.subr.mxu0 0.0
    %263 = vmatpush2.msra.mxu0 0.0
    %264 = vmatprep.subr.mxu0 0.0
    %265 = vmatpush2.msra.mxu0 0.0
    %266 = vmatprep.subr.mxu0 0.0
    %267 = vmatpush2.msra.mxu0 0.0
    %268 = vmatprep.subr.mxu0 0.0
    %269 = vmatpush2.msra.mxu0 0.0
    %270 = vmatprep.subr.mxu0 0.0
    %271 = vmatpush2.msra.mxu0 0.0
    %272 = vmatprep.mubr.f32.mxu0 0.0
    %273 = vmatmul.mubr.f32.gmra.mxu0 %v135
    %v274 = vpop.f32.mrf.mxu0
    %v275 = vadd.f32 0.0, %v274
    %v276 = vpop.f32.mrf.mxu0
    %277 = vdwg.mxu0
    %278 = vmatprep.subr.mxu0 %v126
    %279 = vmatpush1.msra.mxu0 %v125
    %280 = vmatprep.subr.mxu0 %v123
    %281 = vmatpush1.msra.mxu0 %v122
    %282 = vmatprep.subr.mxu0 %v120
    %283 = vmatpush1.msra.mxu0 %v119
    %284 = vmatprep.subr.mxu0 %v117
    %285 = vmatpush1.msra.mxu0 %v116
    %286 = vmatprep.subr.mxu0 %v114
    %287 = vmatpush1.msra.mxu0 %v113
    %288 = vmatprep.subr.mxu0 %v111
    %289 = vmatpush1.msra.mxu0 %v110
    %290 = vmatprep.subr.mxu0 %v108
    %291 = vmatpush1.msra.mxu0 %v107
    %292 = vmatprep.subr.mxu0 %v105
    %293 = vmatpush1.msra.mxu0 %v104
    %294 = vmatprep.subr.mxu0 %v102
    %295 = vmatpush1.msra.mxu0 %v101
    %296 = vmatprep.subr.mxu0 %v99
    %297 = vmatpush1.msra.mxu0 %v98
    %298 = vmatprep.subr.mxu0 %v96
    %299 = vmatpush1.msra.mxu0 %v95
    %300 = vmatprep.subr.mxu0 %v93
    %301 = vmatpush1.msra.mxu0 %v92
    %302 = vmatprep.subr.mxu0 %v90
    %303 = vmatpush1.msra.mxu0 %v89
    %304 = vmatprep.subr.mxu0 %v87
    %305 = vmatpush1.msra.mxu0 %v86
    %306 = vmatprep.subr.mxu0 %v84
    %307 = vmatpush1.msra.mxu0 %v83
    %308 = vmatprep.subr.mxu0 %v81
    %309 = vmatpush1.msra.mxu0 %v80
    %310 = vmatprep.subr.mxu0 0.0
    %311 = vmatpush2.msra.mxu0 0.0
    %312 = vmatprep.subr.mxu0 0.0
    %313 = vmatpush2.msra.mxu0 0.0
    %314 = vmatprep.subr.mxu0 0.0
    %315 = vmatpush2.msra.mxu0 0.0
    %316 = vmatprep.subr.mxu0 0.0
    %317 = vmatpush2.msra.mxu0 0.0
    %318 = vmatprep.subr.mxu0 0.0
    %319 = vmatpush2.msra.mxu0 0.0
    %320 = vmatprep.subr.mxu0 0.0
    %321 = vmatpush2.msra.mxu0 0.0
    %322 = vmatprep.subr.mxu0 0.0
    %323 = vmatpush2.msra.mxu0 0.0
    %324 = vmatprep.subr.mxu0 0.0
    %325 = vmatpush2.msra.mxu0 0.0
    %326 = vmatprep.subr.mxu0 0.0
    %327 = vmatpush2.msra.mxu0 0.0
    %328 = vmatprep.subr.mxu0 0.0
    %329 = vmatpush2.msra.mxu0 0.0
    %330 = vmatprep.subr.mxu0 0.0
    %331 = vmatpush2.msra.mxu0 0.0
    %332 = vmatprep.subr.mxu0 0.0
    %333 = vmatpush2.msra.mxu0 0.0
    %334 = vmatprep.subr.mxu0 0.0
    %335 = vmatpush2.msra.mxu0 0.0
    %336 = vmatprep.subr.mxu0 0.0
    %337 = vmatpush2.msra.mxu0 0.0
    %338 = vmatprep.subr.mxu0 0.0
    %339 = vmatpush2.msra.mxu0 0.0
    %340 = vmatprep.subr.mxu0 0.0
    %341 = vmatpush2.msra.mxu0 0.0
    %342 = vmatprep.mubr.f32.mxu0 0.0
    %343 = vmatmul.mubr.f32.gmra.mxu0 0.0
    %v344 = vpop.f32.mrf.mxu0
    %v345 = vadd.f32 0.0, %v344
    %v346 = vpop.f32.mrf.mxu0
    %v347 = vadd.f32 0.0, %v346
    %348 = vdwg.mxu0
    %349 = vmatprep.subr.mxu0 0.0
    %350 = vmatpush1.msra.mxu0 %v127
    %351 = vmatprep.subr.mxu0 0.0
    %352 = vmatpush1.msra.mxu0 %v124
    %353 = vmatprep.subr.mxu0 0.0
    %354 = vmatpush1.msra.mxu0 %v121
    %355 = vmatprep.subr.mxu0 0.0
    %356 = vmatpush1.msra.mxu0 %v118
    %357 = vmatprep.subr.mxu0 0.0
    %358 = vmatpush1.msra.mxu0 %v115
    %359 = vmatprep.subr.mxu0 0.0
    %360 = vmatpush1.msra.mxu0 %v112
    %361 = vmatprep.subr.mxu0 0.0
    %362 = vmatpush1.msra.mxu0 %v109
    %363 = vmatprep.subr.mxu0 0.0
    %364 = vmatpush1.msra.mxu0 %v106
    %365 = vmatprep.subr.mxu0 0.0
    %366 = vmatpush1.msra.mxu0 %v103
    %367 = vmatprep.subr.mxu0 0.0
    %368 = vmatpush1.msra.mxu0 %v100
    %369 = vmatprep.subr.mxu0 0.0
    %370 = vmatpush1.msra.mxu0 %v97
    %371 = vmatprep.subr.mxu0 0.0
    %372 = vmatpush1.msra.mxu0 %v94
    %373 = vmatprep.subr.mxu0 0.0
    %374 = vmatpush1.msra.mxu0 %v91
    %375 = vmatprep.subr.mxu0 0.0
    %376 = vmatpush1.msra.mxu0 %v88
    %377 = vmatprep.subr.mxu0 0.0
    %378 = vmatpush1.msra.mxu0 %v85
    %379 = vmatprep.subr.mxu0 0.0
    %380 = vmatpush1.msra.mxu0 %v82
    %381 = vmatprep.subr.mxu0 0.0
    %382 = vmatpush2.msra.mxu0 0.0
    %383 = vmatprep.subr.mxu0 0.0
    %384 = vmatpush2.msra.mxu0 0.0
    %385 = vmatprep.subr.mxu0 0.0
    %386 = vmatpush2.msra.mxu0 0.0
    %387 = vmatprep.subr.mxu0 0.0
    %388 = vmatpush2.msra.mxu0 0.0
    %389 = vmatprep.subr.mxu0 0.0
    %390 = vmatpush2.msra.mxu0 0.0
    %391 = vmatprep.subr.mxu0 0.0
    %392 = vmatpush2.msra.mxu0 0.0
    %393 = vmatprep.subr.mxu0 0.0
    %394 = vmatpush2.msra.mxu0 0.0
    %395 = vmatprep.subr.mxu0 0.0
    %396 = vmatpush2.msra.mxu0 0.0
    %397 = vmatprep.subr.mxu0 0.0
    %398 = vmatpush2.msra.mxu0 0.0
    %399 = vmatprep.subr.mxu0 0.0
    %400 = vmatpush2.msra.mxu0 0.0
    %401 = vmatprep.subr.mxu0 0.0
    %402 = vmatpush2.msra.mxu0 0.0
    %403 = vmatprep.subr.mxu0 0.0
    %404 = vmatpush2.msra.mxu0 0.0
    %405 = vmatprep.subr.mxu0 0.0
    %406 = vmatpush2.msra.mxu0 0.0
    %407 = vmatprep.subr.mxu0 0.0
    %408 = vmatpush2.msra.mxu0 0.0
    %409 = vmatprep.subr.mxu0 0.0
    %410 = vmatpush2.msra.mxu0 0.0
    %411 = vmatprep.subr.mxu0 0.0
    %412 = vmatpush2.msra.mxu0 0.0
    %413 = vmatprep.mubr.f32.mxu0 0.0
    %414 = vmatmul.mubr.f32.gmra.mxu0 0.0
    %v415 = vpop.f32.mrf.mxu0
    %v416 = vadd.f32 0.0, %v415
    %v417 = vpop.f32.mrf.mxu0
    %418 = vdwg.mxu0
    %v419 = vadd.f32 %v204, %v345
    %v421 = vlaneseq
    %v422 = vshrl.u32 %v421, 7
    %v423 = vsub.s32 0, %v422
    %v424 = vrot.slane %v128, %v423
    %v426 = vadd.f32 %v419, %v424
    %v427 = vxor.u32 %v426, 2147483648
    %v428 = vmul.f32 %v427, 1.442695
    %v429 = vpow.pop %v428
    %v430 = vadd.f32 %v429, 1.0
    %v431 = vrcp.pop %v430
    %v432 = vmul.f32 1.0, %v431
    %v433 = vadd.f32 %v206, %v347
    %v435 = vlaneseq
    %v436 = vshrl.u32 %v435, 7
    %v437 = vsub.s32 0, %v436
    %v438 = vrot.slane %v129, %v437
    %v440 = vadd.f32 %v433, %v438
    %v441 = vxor.u32 %v440, 2147483648
    %v442 = vmul.f32 %v441, 1.442695
    %v443 = vpow.pop %v442
    %v444 = vadd.f32 %v443, 1.0
    %v445 = vrcp.pop %v444
    %v446 = vmul.f32 1.0, %v445
    %v448 = vlaneseq
    %v449 = vshrl.u32 %v448, 7
    %v450 = vsub.s32 0, %v449
    %v451 = vrot.slane %v130, %v450
    %v453 = vadd.f32 %v275, %v451
    %v455 = vlaneseq
    %v456 = vshrl.u32 %v455, 7
    %v457 = vsub.s32 0, %v456
    %v458 = vrot.slane %v131, %v457
    %v460 = vadd.f32 %v416, %v458
    %v461 = vmul.f32 %v432, %v460
    %v462 = vadd.f32 %v453, %v461
    %v463 = vtanh.pop %v462
    %v464 = vsub.f32 1.0, %v446
    %v465 = vmul.f32 %v464, %v463
    %v466 = vmul.f32 %v446, 0.0
    %v467 = vadd.f32 %v465, %v466
    %s468 = scalar_lea.vmem [#allocation2], 2
    %v469 = vld [vmem:[%s468] sm:$0x3]
    %v471 = vsel %vm133, %v469, 0
    %473 = vmatprep.subr.mxu0 0.0
    %474 = vmatpush1.msra.mxu0 0.0
    %475 = vmatprep.subr.mxu0 0.0
    %476 = vmatpush1.msra.mxu0 0.0
    %477 = vmatprep.subr.mxu0 0.0
    %478 = vmatpush1.msra.mxu0 0.0
    %479 = vmatprep.subr.mxu0 0.0
    %480 = vmatpush1.msra.mxu0 0.0
    %481 = vmatprep.subr.mxu0 0.0
    %482 = vmatpush1.msra.mxu0 0.0
    %483 = vmatprep.subr.mxu0 0.0
    %484 = vmatpush1.msra.mxu0 0.0
    %485 = vmatprep.subr.mxu0 0.0
    %486 = vmatpush1.msra.mxu0 0.0
    %487 = vmatprep.subr.mxu0 0.0
    %488 = vmatpush1.msra.mxu0 0.0
    %489 = vmatprep.subr.mxu0 0.0
    %490 = vmatpush1.msra.mxu0 0.0
    %491 = vmatprep.subr.mxu0 0.0
    %492 = vmatpush1.msra.mxu0 0.0
    %493 = vmatprep.subr.mxu0 0.0
    %494 = vmatpush1.msra.mxu0 0.0
    %495 = vmatprep.subr.mxu0 0.0
    %496 = vmatpush1.msra.mxu0 0.0
    %497 = vmatprep.subr.mxu0 %v78
    %498 = vmatpush1.msra.mxu0 %v77
    %499 = vmatprep.subr.mxu0 %v75
    %500 = vmatpush1.msra.mxu0 %v74
    %501 = vmatprep.subr.mxu0 %v72
    %502 = vmatpush1.msra.mxu0 %v71
    %503 = vmatprep.subr.mxu0 %v69
    %504 = vmatpush1.msra.mxu0 %v68
    %505 = vmatprep.subr.mxu0 0.0
    %506 = vmatpush2.msra.mxu0 0.0
    %507 = vmatprep.subr.mxu0 0.0
    %508 = vmatpush2.msra.mxu0 0.0
    %509 = vmatprep.subr.mxu0 0.0
    %510 = vmatpush2.msra.mxu0 0.0
    %511 = vmatprep.subr.mxu0 0.0
    %512 = vmatpush2.msra.mxu0 0.0
    %513 = vmatprep.subr.mxu0 0.0
    %514 = vmatpush2.msra.mxu0 0.0
    %515 = vmatprep.subr.mxu0 0.0
    %516 = vmatpush2.msra.mxu0 0.0
    %517 = vmatprep.subr.mxu0 0.0
    %518 = vmatpush2.msra.mxu0 0.0
    %519 = vmatprep.subr.mxu0 0.0
    %520 = vmatpush2.msra.mxu0 0.0
    %521 = vmatprep.subr.mxu0 0.0
    %522 = vmatpush2.msra.mxu0 0.0
    %523 = vmatprep.subr.mxu0 0.0
    %524 = vmatpush2.msra.mxu0 0.0
    %525 = vmatprep.subr.mxu0 0.0
    %526 = vmatpush2.msra.mxu0 0.0
    %527 = vmatprep.subr.mxu0 0.0
    %528 = vmatpush2.msra.mxu0 0.0
    %529 = vmatprep.subr.mxu0 0.0
    %530 = vmatpush2.msra.mxu0 0.0
    %531 = vmatprep.subr.mxu0 0.0
    %532 = vmatpush2.msra.mxu0 0.0
    %533 = vmatprep.subr.mxu0 0.0
    %534 = vmatpush2.msra.mxu0 0.0
    %535 = vmatprep.subr.mxu0 0.0
    %536 = vmatpush2.msra.mxu0 0.0
    %537 = vmatprep.mubr.f32.mxu0 0.0
    %538 = vmatmul.mubr.f32.gmra.mxu0 %v471
    %v539 = vpop.f32.mrf.mxu0
    %v540 = vadd.f32 0.0, %v539
    %v541 = vpop.f32.mrf.mxu0
    %v542 = vadd.f32 0.0, %v541
    %543 = vdwg.mxu0
    %544 = vmatprep.subr.mxu0 0.0
    %545 = vmatpush1.msra.mxu0 0.0
    %546 = vmatprep.subr.mxu0 0.0
    %547 = vmatpush1.msra.mxu0 0.0
    %548 = vmatprep.subr.mxu0 0.0
    %549 = vmatpush1.msra.mxu0 0.0
    %550 = vmatprep.subr.mxu0 0.0
    %551 = vmatpush1.msra.mxu0 0.0
    %552 = vmatprep.subr.mxu0 0.0
    %553 = vmatpush1.msra.mxu0 0.0
    %554 = vmatprep.subr.mxu0 0.0
    %555 = vmatpush1.msra.mxu0 0.0
    %556 = vmatprep.subr.mxu0 0.0
    %557 = vmatpush1.msra.mxu0 0.0
    %558 = vmatprep.subr.mxu0 0.0
    %559 = vmatpush1.msra.mxu0 0.0
    %560 = vmatprep.subr.mxu0 0.0
    %561 = vmatpush1.msra.mxu0 0.0
    %562 = vmatprep.subr.mxu0 0.0
    %563 = vmatpush1.msra.mxu0 0.0
    %564 = vmatprep.subr.mxu0 0.0
    %565 = vmatpush1.msra.mxu0 0.0
    %566 = vmatprep.subr.mxu0 0.0
    %567 = vmatpush1.msra.mxu0 0.0
    %568 = vmatprep.subr.mxu0 0.0
    %569 = vmatpush1.msra.mxu0 %v79
    %570 = vmatprep.subr.mxu0 0.0
    %571 = vmatpush1.msra.mxu0 %v76
    %572 = vmatprep.subr.mxu0 0.0
    %573 = vmatpush1.msra.mxu0 %v73
    %574 = vmatprep.subr.mxu0 0.0
    %575 = vmatpush1.msra.mxu0 %v70
    %576 = vmatprep.subr.mxu0 0.0
    %577 = vmatpush2.msra.mxu0 0.0
    %578 = vmatprep.subr.mxu0 0.0
    %579 = vmatpush2.msra.mxu0 0.0
    %580 = vmatprep.subr.mxu0 0.0
    %581 = vmatpush2.msra.mxu0 0.0
    %582 = vmatprep.subr.mxu0 0.0
    %583 = vmatpush2.msra.mxu0 0.0
    %584 = vmatprep.subr.mxu0 0.0
    %585 = vmatpush2.msra.mxu0 0.0
    %586 = vmatprep.subr.mxu0 0.0
    %587 = vmatpush2.msra.mxu0 0.0
    %588 = vmatprep.subr.mxu0 0.0
    %589 = vmatpush2.msra.mxu0 0.0
    %590 = vmatprep.subr.mxu0 0.0
    %591 = vmatpush2.msra.mxu0 0.0
    %592 = vmatprep.subr.mxu0 0.0
    %593 = vmatpush2.msra.mxu0 0.0
    %594 = vmatprep.subr.mxu0 0.0
    %595 = vmatpush2.msra.mxu0 0.0
    %596 = vmatprep.subr.mxu0 0.0
    %597 = vmatpush2.msra.mxu0 0.0
    %598 = vmatprep.subr.mxu0 0.0
    %599 = vmatpush2.msra.mxu0 0.0
    %600 = vmatprep.subr.mxu0 0.0
    %601 = vmatpush2.msra.mxu0 0.0
    %602 = vmatprep.subr.mxu0 0.0
    %603 = vmatpush2.msra.mxu0 0.0
    %604 = vmatprep.subr.mxu0 0.0
    %605 = vmatpush2.msra.mxu0 0.0
    %606 = vmatprep.subr.mxu0 0.0
    %607 = vmatpush2.msra.mxu0 0.0
    %608 = vmatprep.mubr.f32.mxu0 0.0
    %609 = vmatmul.mubr.f32.gmra.mxu0 %v471
    %v610 = vpop.f32.mrf.mxu0
    %v611 = vadd.f32 0.0, %v610
    %v612 = vpop.f32.mrf.mxu0
    %613 = vdwg.mxu0
    %614 = vmatprep.subr.mxu0 %v126
    %615 = vmatpush1.msra.mxu0 %v125
    %616 = vmatprep.subr.mxu0 %v123
    %617 = vmatpush1.msra.mxu0 %v122
    %618 = vmatprep.subr.mxu0 %v120
    %619 = vmatpush1.msra.mxu0 %v119
    %620 = vmatprep.subr.mxu0 %v117
    %621 = vmatpush1.msra.mxu0 %v116
    %622 = vmatprep.subr.mxu0 %v114
    %623 = vmatpush1.msra.mxu0 %v113
    %624 = vmatprep.subr.mxu0 %v111
    %625 = vmatpush1.msra.mxu0 %v110
    %626 = vmatprep.subr.mxu0 %v108
    %627 = vmatpush1.msra.mxu0 %v107
    %628 = vmatprep.subr.mxu0 %v105
    %629 = vmatpush1.msra.mxu0 %v104
    %630 = vmatprep.subr.mxu0 %v102
    %631 = vmatpush1.msra.mxu0 %v101
    %632 = vmatprep.subr.mxu0 %v99
    %633 = vmatpush1.msra.mxu0 %v98
    %634 = vmatprep.subr.mxu0 %v96
    %635 = vmatpush1.msra.mxu0 %v95
    %636 = vmatprep.subr.mxu0 %v93
    %637 = vmatpush1.msra.mxu0 %v92
    %638 = vmatprep.subr.mxu0 %v90
    %639 = vmatpush1.msra.mxu0 %v89
    %640 = vmatprep.subr.mxu0 %v87
    %641 = vmatpush1.msra.mxu0 %v86
    %642 = vmatprep.subr.mxu0 %v84
    %643 = vmatpush1.msra.mxu0 %v83
    %644 = vmatprep.subr.mxu0 %v81
    %645 = vmatpush1.msra.mxu0 %v80
    %646 = vmatprep.subr.mxu0 0.0
    %647 = vmatpush2.msra.mxu0 0.0
    %648 = vmatprep.subr.mxu0 0.0
    %649 = vmatpush2.msra.mxu0 0.0
    %650 = vmatprep.subr.mxu0 0.0
    %651 = vmatpush2.msra.mxu0 0.0
    %652 = vmatprep.subr.mxu0 0.0
    %653 = vmatpush2.msra.mxu0 0.0
    %654 = vmatprep.subr.mxu0 0.0
    %655 = vmatpush2.msra.mxu0 0.0
    %656 = vmatprep.subr.mxu0 0.0
    %657 = vmatpush2.msra.mxu0 0.0
    %658 = vmatprep.subr.mxu0 0.0
    %659 = vmatpush2.msra.mxu0 0.0
    %660 = vmatprep.subr.mxu0 0.0
    %661 = vmatpush2.msra.mxu0 0.0
    %662 = vmatprep.subr.mxu0 0.0
    %663 = vmatpush2.msra.mxu0 0.0
    %664 = vmatprep.subr.mxu0 0.0
    %665 = vmatpush2.msra.mxu0 0.0
    %666 = vmatprep.subr.mxu0 0.0
    %667 = vmatpush2.msra.mxu0 0.0
    %668 = vmatprep.subr.mxu0 0.0
    %669 = vmatpush2.msra.mxu0 0.0
    %670 = vmatprep.subr.mxu0 0.0
    %671 = vmatpush2.msra.mxu0 0.0
    %672 = vmatprep.subr.mxu0 0.0
    %673 = vmatpush2.msra.mxu0 0.0
    %674 = vmatprep.subr.mxu0 0.0
    %675 = vmatpush2.msra.mxu0 0.0
    %676 = vmatprep.subr.mxu0 0.0
    %677 = vmatpush2.msra.mxu0 0.0
    %678 = vmatprep.mubr.f32.mxu0 0.0
    %679 = vmatmul.mubr.f32.gmra.mxu0 %v467
    %v680 = vpop.f32.mrf.mxu0
    %v681 = vadd.f32 0.0, %v680
    %v682 = vpop.f32.mrf.mxu0
    %v683 = vadd.f32 0.0, %v682
    %684 = vdwg.mxu0
    %685 = vmatprep.subr.mxu0 0.0
    %686 = vmatpush1.msra.mxu0 %v127
    %687 = vmatprep.subr.mxu0 0.0
    %688 = vmatpush1.msra.mxu0 %v124
    %689 = vmatprep.subr.mxu0 0.0
    %690 = vmatpush1.msra.mxu0 %v121
    %691 = vmatprep.subr.mxu0 0.0
    %692 = vmatpush1.msra.mxu0 %v118
    %693 = vmatprep.subr.mxu0 0.0
    %694 = vmatpush1.msra.mxu0 %v115
    %695 = vmatprep.subr.mxu0 0.0
    %696 = vmatpush1.msra.mxu0 %v112
    %697 = vmatprep.subr.mxu0 0.0
    %698 = vmatpush1.msra.mxu0 %v109
    %699 = vmatprep.subr.mxu0 0.0
    %700 = vmatpush1.msra.mxu0 %v106
    %701 = vmatprep.subr.mxu0 0.0
    %702 = vmatpush1.msra.mxu0 %v103
    %703 = vmatprep.subr.mxu0 0.0
    %704 = vmatpush1.msra.mxu0 %v100
    %705 = vmatprep.subr.mxu0 0.0
    %706 = vmatpush1.msra.mxu0 %v97
    %707 = vmatprep.subr.mxu0 0.0
    %708 = vmatpush1.msra.mxu0 %v94
    %709 = vmatprep.subr.mxu0 0.0
    %710 = vmatpush1.msra.mxu0 %v91
    %711 = vmatprep.subr.mxu0 0.0
    %712 = vmatpush1.msra.mxu0 %v88
    %713 = vmatprep.subr.mxu0 0.0
    %714 = vmatpush1.msra.mxu0 %v85
    %715 = vmatprep.subr.mxu0 0.0
    %716 = vmatpush1.msra.mxu0 %v82
    %717 = vmatprep.subr.mxu0 0.0
    %718 = vmatpush2.msra.mxu0 0.0
    %719 = vmatprep.subr.mxu0 0.0
    %720 = vmatpush2.msra.mxu0 0.0
    %721 = vmatprep.subr.mxu0 0.0
    %722 = vmatpush2.msra.mxu0 0.0
    %723 = vmatprep.subr.mxu0 0.0
    %724 = vmatpush2.msra.mxu0 0.0
    %725 = vmatprep.subr.mxu0 0.0
    %726 = vmatpush2.msra.mxu0 0.0
    %727 = vmatprep.subr.mxu0 0.0
    %728 = vmatpush2.msra.mxu0 0.0
    %729 = vmatprep.subr.mxu0 0.0
    %730 = vmatpush2.msra.mxu0 0.0
    %731 = vmatprep.subr.mxu0 0.0
    %732 = vmatpush2.msra.mxu0 0.0
    %733 = vmatprep.subr.mxu0 0.0
    %734 = vmatpush2.msra.mxu0 0.0
    %735 = vmatprep.subr.mxu0 0.0
    %736 = vmatpush2.msra.mxu0 0.0
    %737 = vmatprep.subr.mxu0 0.0
    %738 = vmatpush2.msra.mxu0 0.0
    %739 = vmatprep.subr.mxu0 0.0
    %740 = vmatpush2.msra.mxu0 0.0
    %741 = vmatprep.subr.mxu0 0.0
    %742 = vmatpush2.msra.mxu0 0.0
    %743 = vmatprep.subr.mxu0 0.0
    %744 = vmatpush2.msra.mxu0 0.0
    %745 = vmatprep.subr.mxu0 0.0
    %746 = vmatpush2.msra.mxu0 0.0
    %747 = vmatprep.subr.mxu0 0.0
    %748 = vmatpush2.msra.mxu0 0.0
    %749 = vmatprep.mubr.f32.mxu0 0.0
    %750 = vmatmul.mubr.f32.gmra.mxu0 %v467
    %v751 = vpop.f32.mrf.mxu0
    %v752 = vadd.f32 0.0, %v751
    %v753 = vpop.f32.mrf.mxu0
    %754 = vdwg.mxu0
    %v755 = vadd.f32 %v540, %v681
    %v756 = vadd.f32 %v755, %v424
    %v757 = vxor.u32 %v756, 2147483648
    %v758 = vmul.f32 %v757, 1.442695
    %v759 = vpow.pop %v758
    %v760 = vadd.f32 %v759, 1.0
    %v761 = vrcp.pop %v760
    %v762 = vmul.f32 1.0, %v761
    %v763 = vadd.f32 %v542, %v683
    %v764 = vadd.f32 %v763, %v438
    %v765 = vxor.u32 %v764, 2147483648
    %v766 = vmul.f32 %v765, 1.442695
    %v767 = vpow.pop %v766
    %v768 = vadd.f32 %v767, 1.0
    %v769 = vrcp.pop %v768
    %v770 = vmul.f32 1.0, %v769
    %v771 = vadd.f32 %v611, %v451
    %v772 = vadd.f32 %v752, %v458
    %v773 = vmul.f32 %v762, %v772
    %v774 = vadd.f32 %v771, %v773
    %v775 = vtanh.pop %v774
    %v776 = vsub.f32 1.0, %v770
    %v777 = vmul.f32 %v776, %v775
    %v778 = vmul.f32 %v770, %v467
    %v779 = vadd.f32 %v777, %v778
    %s780 = scalar_lea.vmem [#allocation2], 4
    %v781 = vld [vmem:[%s780] sm:$0x3]
    %v783 = vsel %vm133, %v781, 0
    %785 = vmatprep.subr.mxu0 0.0
    %786 = vmatpush1.msra.mxu0 0.0
    %787 = vmatprep.subr.mxu0 0.0
    %788 = vmatpush1.msra.mxu0 0.0
    %789 = vmatprep.subr.mxu0 0.0
    %790 = vmatpush1.msra.mxu0 0.0
    %791 = vmatprep.subr.mxu0 0.0
    %792 = vmatpush1.msra.mxu0 0.0
    %793 = vmatprep.subr.mxu0 0.0
    %794 = vmatpush1.msra.mxu0 0.0
    %795 = vmatprep.subr.mxu0 0.0
    %796 = vmatpush1.msra.mxu0 0.0
    %797 = vmatprep.subr.mxu0 0.0
    %798 = vmatpush1.msra.mxu0 0.0
    %799 = vmatprep.subr.mxu0 0.0
    %800 = vmatpush1.msra.mxu0 0.0
    %801 = vmatprep.subr.mxu0 0.0
    %802 = vmatpush1.msra.mxu0 0.0
    %803 = vmatprep.subr.mxu0 0.0
    %804 = vmatpush1.msra.mxu0 0.0
    %805 = vmatprep.subr.mxu0 0.0
    %806 = vmatpush1.msra.mxu0 0.0
    %807 = vmatprep.subr.mxu0 0.0
    %808 = vmatpush1.msra.mxu0 0.0
    %809 = vmatprep.subr.mxu0 %v78
    %810 = vmatpush1.msra.mxu0 %v77
    %811 = vmatprep.subr.mxu0 %v75
    %812 = vmatpush1.msra.mxu0 %v74
    %813 = vmatprep.subr.mxu0 %v72
    %814 = vmatpush1.msra.mxu0 %v71
    %815 = vmatprep.subr.mxu0 %v69
    %816 = vmatpush1.msra.mxu0 %v68
    %817 = vmatprep.subr.mxu0 0.0
    %818 = vmatpush2.msra.mxu0 0.0
    %819 = vmatprep.subr.mxu0 0.0
    %820 = vmatpush2.msra.mxu0 0.0
    %821 = vmatprep.subr.mxu0 0.0
    %822 = vmatpush2.msra.mxu0 0.0
    %823 = vmatprep.subr.mxu0 0.0
    %824 = vmatpush2.msra.mxu0 0.0
    %825 = vmatprep.subr.mxu0 0.0
    %826 = vmatpush2.msra.mxu0 0.0
    %827 = vmatprep.subr.mxu0 0.0
    %828 = vmatpush2.msra.mxu0 0.0
    %829 = vmatprep.subr.mxu0 0.0
    %830 = vmatpush2.msra.mxu0 0.0
    %831 = vmatprep.subr.mxu0 0.0
    %832 = vmatpush2.msra.mxu0 0.0
    %833 = vmatprep.subr.mxu0 0.0
    %834 = vmatpush2.msra.mxu0 0.0
    %835 = vmatprep.subr.mxu0 0.0
    %836 = vmatpush2.msra.mxu0 0.0
    %837 = vmatprep.subr.mxu0 0.0
    %838 = vmatpush2.msra.mxu0 0.0
    %839 = vmatprep.subr.mxu0 0.0
    %840 = vmatpush2.msra.mxu0 0.0
    %841 = vmatprep.subr.mxu0 0.0
    %842 = vmatpush2.msra.mxu0 0.0
    %843 = vmatprep.subr.mxu0 0.0
    %844 = vmatpush2.msra.mxu0 0.0
    %845 = vmatprep.subr.mxu0 0.0
    %846 = vmatpush2.msra.mxu0 0.0
    %847 = vmatprep.subr.mxu0 0.0
    %848 = vmatpush2.msra.mxu0 0.0
    %849 = vmatprep.mubr.f32.mxu0 0.0
    %850 = vmatmul.mubr.f32.gmra.mxu0 %v783
    %v851 = vpop.f32.mrf.mxu0
    %v852 = vadd.f32 0.0, %v851
    %v853 = vpop.f32.mrf.mxu0
    %v854 = vadd.f32 0.0, %v853
    %855 = vdwg.mxu0
    %856 = vmatprep.subr.mxu0 0.0
    %857 = vmatpush1.msra.mxu0 0.0
    %858 = vmatprep.subr.mxu0 0.0
    %859 = vmatpush1.msra.mxu0 0.0
    %860 = vmatprep.subr.mxu0 0.0
    %861 = vmatpush1.msra.mxu0 0.0
    %862 = vmatprep.subr.mxu0 0.0
    %863 = vmatpush1.msra.mxu0 0.0
    %864 = vmatprep.subr.mxu0 0.0
    %865 = vmatpush1.msra.mxu0 0.0
    %866 = vmatprep.subr.mxu0 0.0
    %867 = vmatpush1.msra.mxu0 0.0
    %868 = vmatprep.subr.mxu0 0.0
    %869 = vmatpush1.msra.mxu0 0.0
    %870 = vmatprep.subr.mxu0 0.0
    %871 = vmatpush1.msra.mxu0 0.0
    %872 = vmatprep.subr.mxu0 0.0
    %873 = vmatpush1.msra.mxu0 0.0
    %874 = vmatprep.subr.mxu0 0.0
    %875 = vmatpush1.msra.mxu0 0.0
    %876 = vmatprep.subr.mxu0 0.0
    %877 = vmatpush1.msra.mxu0 0.0
    %878 = vmatprep.subr.mxu0 0.0
    %879 = vmatpush1.msra.mxu0 0.0
    %880 = vmatprep.subr.mxu0 0.0
    %881 = vmatpush1.msra.mxu0 %v79
    %882 = vmatprep.subr.mxu0 0.0
    %883 = vmatpush1.msra.mxu0 %v76
    %884 = vmatprep.subr.mxu0 0.0
    %885 = vmatpush1.msra.mxu0 %v73
    %886 = vmatprep.subr.mxu0 0.0
    %887 = vmatpush1.msra.mxu0 %v70
    %888 = vmatprep.subr.mxu0 0.0
    %889 = vmatpush2.msra.mxu0 0.0
    %890 = vmatprep.subr.mxu0 0.0
    %891 = vmatpush2.msra.mxu0 0.0
    %892 = vmatprep.subr.mxu0 0.0
    %893 = vmatpush2.msra.mxu0 0.0
    %894 = vmatprep.subr.mxu0 0.0
    %895 = vmatpush2.msra.mxu0 0.0
    %896 = vmatprep.subr.mxu0 0.0
    %897 = vmatpush2.msra.mxu0 0.0
    %898 = vmatprep.subr.mxu0 0.0
    %899 = vmatpush2.msra.mxu0 0.0
    %900 = vmatprep.subr.mxu0 0.0
    %901 = vmatpush2.msra.mxu0 0.0
    %902 = vmatprep.subr.mxu0 0.0
    %903 = vmatpush2.msra.mxu0 0.0
    %904 = vmatprep.subr.mxu0 0.0
    %905 = vmatpush2.msra.mxu0 0.0
    %906 = vmatprep.subr.mxu0 0.0
    %907 = vmatpush2.msra.mxu0 0.0
    %908 = vmatprep.subr.mxu0 0.0
    %909 = vmatpush2.msra.mxu0 0.0
    %910 = vmatprep.subr.mxu0 0.0
    %911 = vmatpush2.msra.mxu0 0.0
    %912 = vmatprep.subr.mxu0 0.0
    %913 = vmatpush2.msra.mxu0 0.0
    %914 = vmatprep.subr.mxu0 0.0
    %915 = vmatpush2.msra.mxu0 0.0
    %916 = vmatprep.subr.mxu0 0.0
    %917 = vmatpush2.msra.mxu0 0.0
    %918 = vmatprep.subr.mxu0 0.0
    %919 = vmatpush2.msra.mxu0 0.0
    %920 = vmatprep.mubr.f32.mxu0 0.0
    %921 = vmatmul.mubr.f32.gmra.mxu0 %v783
    %v922 = vpop.f32.mrf.mxu0
    %v923 = vadd.f32 0.0, %v922
    %v924 = vpop.f32.mrf.mxu0
    %925 = vdwg.mxu0
    %926 = vmatprep.subr.mxu0 %v126
    %927 = vmatpush1.msra.mxu0 %v125
    %928 = vmatprep.subr.mxu0 %v123
    %929 = vmatpush1.msra.mxu0 %v122
    %930 = vmatprep.subr.mxu0 %v120
    %931 = vmatpush1.msra.mxu0 %v119
    %932 = vmatprep.subr.mxu0 %v117
    %933 = vmatpush1.msra.mxu0 %v116
    %934 = vmatprep.subr.mxu0 %v114
    %935 = vmatpush1.msra.mxu0 %v113
    %936 = vmatprep.subr.mxu0 %v111
    %937 = vmatpush1.msra.mxu0 %v110
    %938 = vmatprep.subr.mxu0 %v108
    %939 = vmatpush1.msra.mxu0 %v107
    %940 = vmatprep.subr.mxu0 %v105
    %941 = vmatpush1.msra.mxu0 %v104
    %942 = vmatprep.subr.mxu0 %v102
    %943 = vmatpush1.msra.mxu0 %v101
    %944 = vmatprep.subr.mxu0 %v99
    %945 = vmatpush1.msra.mxu0 %v98
    %946 = vmatprep.subr.mxu0 %v96
    %947 = vmatpush1.msra.mxu0 %v95
    %948 = vmatprep.subr.mxu0 %v93
    %949 = vmatpush1.msra.mxu0 %v92
    %950 = vmatprep.subr.mxu0 %v90
    %951 = vmatpush1.msra.mxu0 %v89
    %952 = vmatprep.subr.mxu0 %v87
    %953 = vmatpush1.msra.mxu0 %v86
    %954 = vmatprep.subr.mxu0 %v84
    %955 = vmatpush1.msra.mxu0 %v83
    %956 = vmatprep.subr.mxu0 %v81
    %957 = vmatpush1.msra.mxu0 %v80
    %958 = vmatprep.subr.mxu0 0.0
    %959 = vmatpush2.msra.mxu0 0.0
    %960 = vmatprep.subr.mxu0 0.0
    %961 = vmatpush2.msra.mxu0 0.0
    %962 = vmatprep.subr.mxu0 0.0
    %963 = vmatpush2.msra.mxu0 0.0
    %964 = vmatprep.subr.mxu0 0.0
    %965 = vmatpush2.msra.mxu0 0.0
    %966 = vmatprep.subr.mxu0 0.0
    %967 = vmatpush2.msra.mxu0 0.0
    %968 = vmatprep.subr.mxu0 0.0
    %969 = vmatpush2.msra.mxu0 0.0
    %970 = vmatprep.subr.mxu0 0.0
    %971 = vmatpush2.msra.mxu0 0.0
    %972 = vmatprep.subr.mxu0 0.0
    %973 = vmatpush2.msra.mxu0 0.0
    %974 = vmatprep.subr.mxu0 0.0
    %975 = vmatpush2.msra.mxu0 0.0
    %976 = vmatprep.subr.mxu0 0.0
    %977 = vmatpush2.msra.mxu0 0.0
    %978 = vmatprep.subr.mxu0 0.0
    %979 = vmatpush2.msra.mxu0 0.0
    %980 = vmatprep.subr.mxu0 0.0
    %981 = vmatpush2.msra.mxu0 0.0
    %982 = vmatprep.subr.mxu0 0.0
    %983 = vmatpush2.msra.mxu0 0.0
    %984 = vmatprep.subr.mxu0 0.0
    %985 = vmatpush2.msra.mxu0 0.0
    %986 = vmatprep.subr.mxu0 0.0
    %987 = vmatpush2.msra.mxu0 0.0
    %988 = vmatprep.subr.mxu0 0.0
    %989 = vmatpush2.msra.mxu0 0.0
    %990 = vmatprep.mubr.f32.mxu0 0.0
    %991 = vmatmul.mubr.f32.gmra.mxu0 %v779
    %v992 = vpop.f32.mrf.mxu0
    %v993 = vadd.f32 0.0, %v992
    %v994 = vpop.f32.mrf.mxu0
    %v995 = vadd.f32 0.0, %v994
    %996 = vdwg.mxu0
    %997 = vmatprep.subr.mxu0 0.0
    %998 = vmatpush1.msra.mxu0 %v127
    %999 = vmatprep.subr.mxu0 0.0
    %1000 = vmatpush1.msra.mxu0 %v124
    %1001 = vmatprep.subr.mxu0 0.0
    %1002 = vmatpush1.msra.mxu0 %v121
    %1003 = vmatprep.subr.mxu0 0.0
    %1004 = vmatpush1.msra.mxu0 %v118
    %1005 = vmatprep.subr.mxu0 0.0
    %1006 = vmatpush1.msra.mxu0 %v115
    %1007 = vmatprep.subr.mxu0 0.0
    %1008 = vmatpush1.msra.mxu0 %v112
    %1009 = vmatprep.subr.mxu0 0.0
    %1010 = vmatpush1.msra.mxu0 %v109
    %1011 = vmatprep.subr.mxu0 0.0
    %1012 = vmatpush1.msra.mxu0 %v106
    %1013 = vmatprep.subr.mxu0 0.0
    %1014 = vmatpush1.msra.mxu0 %v103
    %1015 = vmatprep.subr.mxu0 0.0
    %1016 = vmatpush1.msra.mxu0 %v100
    %1017 = vmatprep.subr.mxu0 0.0
    %1018 = vmatpush1.msra.mxu0 %v97
    %1019 = vmatprep.subr.mxu0 0.0
    %1020 = vmatpush1.msra.mxu0 %v94
    %1021 = vmatprep.subr.mxu0 0.0
    %1022 = vmatpush1.msra.mxu0 %v91
    %1023 = vmatprep.subr.mxu0 0.0
    %1024 = vmatpush1.msra.mxu0 %v88
    %1025 = vmatprep.subr.mxu0 0.0
    %1026 = vmatpush1.msra.mxu0 %v85
    %1027 = vmatprep.subr.mxu0 0.0
    %1028 = vmatpush1.msra.mxu0 %v82
    %1029 = vmatprep.subr.mxu0 0.0
    %1030 = vmatpush2.msra.mxu0 0.0
    %1031 = vmatprep.subr.mxu0 0.0
    %1032 = vmatpush2.msra.mxu0 0.0
    %1033 = vmatprep.subr.mxu0 0.0
    %1034 = vmatpush2.msra.mxu0 0.0
    %1035 = vmatprep.subr.mxu0 0.0
    %1036 = vmatpush2.msra.mxu0 0.0
    %1037 = vmatprep.subr.mxu0 0.0
    %1038 = vmatpush2.msra.mxu0 0.0
    %1039 = vmatprep.subr.mxu0 0.0
    %1040 = vmatpush2.msra.mxu0 0.0
    %1041 = vmatprep.subr.mxu0 0.0
    %1042 = vmatpush2.msra.mxu0 0.0
    %1043 = vmatprep.subr.mxu0 0.0
    %1044 = vmatpush2.msra.mxu0 0.0
    %1045 = vmatprep.subr.mxu0 0.0
    %1046 = vmatpush2.msra.mxu0 0.0
    %1047 = vmatprep.subr.mxu0 0.0
    %1048 = vmatpush2.msra.mxu0 0.0
    %1049 = vmatprep.subr.mxu0 0.0
    %1050 = vmatpush2.msra.mxu0 0.0
    %1051 = vmatprep.subr.mxu0 0.0
    %1052 = vmatpush2.msra.mxu0 0.0
    %1053 = vmatprep.subr.mxu0 0.0
    %1054 = vmatpush2.msra.mxu0 0.0
    %1055 = vmatprep.subr.mxu0 0.0
    %1056 = vmatpush2.msra.mxu0 0.0
    %1057 = vmatprep.subr.mxu0 0.0
    %1058 = vmatpush2.msra.mxu0 0.0
    %1059 = vmatprep.subr.mxu0 0.0
    %1060 = vmatpush2.msra.mxu0 0.0
    %1061 = vmatprep.mubr.f32.mxu0 0.0
    %1062 = vmatmul.mubr.f32.gmra.mxu0 %v779
    %v1063 = vpop.f32.mrf.mxu0
    %v1064 = vadd.f32 0.0, %v1063
    %v1065 = vpop.f32.mrf.mxu0
    %1066 = vdwg.mxu0
    %v1067 = vadd.f32 %v852, %v993
    %v1068 = vadd.f32 %v1067, %v424
    %v1069 = vxor.u32 %v1068, 2147483648
    %v1070 = vmul.f32 %v1069, 1.442695
    %v1071 = vpow.pop %v1070
    %v1072 = vadd.f32 %v1071, 1.0
    %v1073 = vrcp.pop %v1072
    %v1074 = vmul.f32 1.0, %v1073
    %v1075 = vadd.f32 %v854, %v995
    %v1076 = vadd.f32 %v1075, %v438
    %v1077 = vxor.u32 %v1076, 2147483648
    %v1078 = vmul.f32 %v1077, 1.442695
    %v1079 = vpow.pop %v1078
    %v1080 = vadd.f32 %v1079, 1.0
    %v1081 = vrcp.pop %v1080
    %v1082 = vmul.f32 1.0, %v1081
    %v1083 = vadd.f32 %v923, %v451
    %v1084 = vadd.f32 %v1064, %v458
    %v1085 = vmul.f32 %v1074, %v1084
    %v1086 = vadd.f32 %v1083, %v1085
    %v1087 = vtanh.pop %v1086
    %v1088 = vsub.f32 1.0, %v1082
    %v1089 = vmul.f32 %v1088, %v1087
    %v1090 = vmul.f32 %v1082, %v779
    %v1091 = vadd.f32 %v1089, %v1090
    %s1092 = scalar_lea.vmem [#allocation2], 6
    %v1093 = vld [vmem:[%s1092] sm:$0x3]
    %v1095 = vsel %vm133, %v1093, 0
    %1097 = vmatprep.subr.mxu0 0.0
    %1098 = vmatpush1.msra.mxu0 0.0
    %1099 = vmatprep.subr.mxu0 0.0
    %1100 = vmatpush1.msra.mxu0 0.0
    %1101 = vmatprep.subr.mxu0 0.0
    %1102 = vmatpush1.msra.mxu0 0.0
    %1103 = vmatprep.subr.mxu0 0.0
    %1104 = vmatpush1.msra.mxu0 0.0
    %1105 = vmatprep.subr.mxu0 0.0
    %1106 = vmatpush1.msra.mxu0 0.0
    %1107 = vmatprep.subr.mxu0 0.0
    %1108 = vmatpush1.msra.mxu0 0.0
    %1109 = vmatprep.subr.mxu0 0.0
    %1110 = vmatpush1.msra.mxu0 0.0
    %1111 = vmatprep.subr.mxu0 0.0
    %1112 = vmatpush1.msra.mxu0 0.0
    %1113 = vmatprep.subr.mxu0 0.0
    %1114 = vmatpush1.msra.mxu0 0.0
    %1115 = vmatprep.subr.mxu0 0.0
    %1116 = vmatpush1.msra.mxu0 0.0
    %1117 = vmatprep.subr.mxu0 0.0
    %1118 = vmatpush1.msra.mxu0 0.0
    %1119 = vmatprep.subr.mxu0 0.0
    %1120 = vmatpush1.msra.mxu0 0.0
    %1121 = vmatprep.subr.mxu0 %v78
    %1122 = vmatpush1.msra.mxu0 %v77
    %1123 = vmatprep.subr.mxu0 %v75
    %1124 = vmatpush1.msra.mxu0 %v74
    %1125 = vmatprep.subr.mxu0 %v72
    %1126 = vmatpush1.msra.mxu0 %v71
    %1127 = vmatprep.subr.mxu0 %v69
    %1128 = vmatpush1.msra.mxu0 %v68
    %1129 = vmatprep.subr.mxu0 0.0
    %1130 = vmatpush2.msra.mxu0 0.0
    %1131 = vmatprep.subr.mxu0 0.0
    %1132 = vmatpush2.msra.mxu0 0.0
    %1133 = vmatprep.subr.mxu0 0.0
    %1134 = vmatpush2.msra.mxu0 0.0
    %1135 = vmatprep.subr.mxu0 0.0
    %1136 = vmatpush2.msra.mxu0 0.0
    %1137 = vmatprep.subr.mxu0 0.0
    %1138 = vmatpush2.msra.mxu0 0.0
    %1139 = vmatprep.subr.mxu0 0.0
    %1140 = vmatpush2.msra.mxu0 0.0
    %1141 = vmatprep.subr.mxu0 0.0
    %1142 = vmatpush2.msra.mxu0 0.0
    %1143 = vmatprep.subr.mxu0 0.0
    %1144 = vmatpush2.msra.mxu0 0.0
    %1145 = vmatprep.subr.mxu0 0.0
    %1146 = vmatpush2.msra.mxu0 0.0
    %1147 = vmatprep.subr.mxu0 0.0
    %1148 = vmatpush2.msra.mxu0 0.0
    %1149 = vmatprep.subr.mxu0 0.0
    %1150 = vmatpush2.msra.mxu0 0.0
    %1151 = vmatprep.subr.mxu0 0.0
    %1152 = vmatpush2.msra.mxu0 0.0
    %1153 = vmatprep.subr.mxu0 0.0
    %1154 = vmatpush2.msra.mxu0 0.0
    %1155 = vmatprep.subr.mxu0 0.0
    %1156 = vmatpush2.msra.mxu0 0.0
    %1157 = vmatprep.subr.mxu0 0.0
    %1158 = vmatpush2.msra.mxu0 0.0
    %1159 = vmatprep.subr.mxu0 0.0
    %1160 = vmatpush2.msra.mxu0 0.0
    %1161 = vmatprep.mubr.f32.mxu0 0.0
    %1162 = vmatmul.mubr.f32.gmra.mxu0 %v1095
    %v1163 = vpop.f32.mrf.mxu0
    %v1164 = vadd.f32 0.0, %v1163
    %v1165 = vpop.f32.mrf.mxu0
    %v1166 = vadd.f32 0.0, %v1165
    %1167 = vdwg.mxu0
    %1168 = vmatprep.subr.mxu0 0.0
    %1169 = vmatpush1.msra.mxu0 0.0
    %1170 = vmatprep.subr.mxu0 0.0
    %1171 = vmatpush1.msra.mxu0 0.0
    %1172 = vmatprep.subr.mxu0 0.0
    %1173 = vmatpush1.msra.mxu0 0.0
    %1174 = vmatprep.subr.mxu0 0.0
    %1175 = vmatpush1.msra.mxu0 0.0
    %1176 = vmatprep.subr.mxu0 0.0
    %1177 = vmatpush1.msra.mxu0 0.0
    %1178 = vmatprep.subr.mxu0 0.0
    %1179 = vmatpush1.msra.mxu0 0.0
    %1180 = vmatprep.subr.mxu0 0.0
    %1181 = vmatpush1.msra.mxu0 0.0
    %1182 = vmatprep.subr.mxu0 0.0
    %1183 = vmatpush1.msra.mxu0 0.0
    %1184 = vmatprep.subr.mxu0 0.0
    %1185 = vmatpush1.msra.mxu0 0.0
    %1186 = vmatprep.subr.mxu0 0.0
    %1187 = vmatpush1.msra.mxu0 0.0
    %1188 = vmatprep.subr.mxu0 0.0
    %1189 = vmatpush1.msra.mxu0 0.0
    %1190 = vmatprep.subr.mxu0 0.0
    %1191 = vmatpush1.msra.mxu0 0.0
    %1192 = vmatprep.subr.mxu0 0.0
    %1193 = vmatpush1.msra.mxu0 %v79
    %1194 = vmatprep.subr.mxu0 0.0
    %1195 = vmatpush1.msra.mxu0 %v76
    %1196 = vmatprep.subr.mxu0 0.0
    %1197 = vmatpush1.msra.mxu0 %v73
    %1198 = vmatprep.subr.mxu0 0.0
    %1199 = vmatpush1.msra.mxu0 %v70
    %1200 = vmatprep.subr.mxu0 0.0
    %1201 = vmatpush2.msra.mxu0 0.0
    %1202 = vmatprep.subr.mxu0 0.0
    %1203 = vmatpush2.msra.mxu0 0.0
    %1204 = vmatprep.subr.mxu0 0.0
    %1205 = vmatpush2.msra.mxu0 0.0
    %1206 = vmatprep.subr.mxu0 0.0
    %1207 = vmatpush2.msra.mxu0 0.0
    %1208 = vmatprep.subr.mxu0 0.0
    %1209 = vmatpush2.msra.mxu0 0.0
    %1210 = vmatprep.subr.mxu0 0.0
    %1211 = vmatpush2.msra.mxu0 0.0
    %1212 = vmatprep.subr.mxu0 0.0
    %1213 = vmatpush2.msra.mxu0 0.0
    %1214 = vmatprep.subr.mxu0 0.0
    %1215 = vmatpush2.msra.mxu0 0.0
    %1216 = vmatprep.subr.mxu0 0.0
    %1217 = vmatpush2.msra.mxu0 0.0
    %1218 = vmatprep.subr.mxu0 0.0
    %1219 = vmatpush2.msra.mxu0 0.0
    %1220 = vmatprep.subr.mxu0 0.0
    %1221 = vmatpush2.msra.mxu0 0.0
    %1222 = vmatprep.subr.mxu0 0.0
    %1223 = vmatpush2.msra.mxu0 0.0
    %1224 = vmatprep.subr.mxu0 0.0
    %1225 = vmatpush2.msra.mxu0 0.0
    %1226 = vmatprep.subr.mxu0 0.0
    %1227 = vmatpush2.msra.mxu0 0.0
    %1228 = vmatprep.subr.mxu0 0.0
    %1229 = vmatpush2.msra.mxu0 0.0
    %1230 = vmatprep.subr.mxu0 0.0
    %1231 = vmatpush2.msra.mxu0 0.0
    %1232 = vmatprep.mubr.f32.mxu0 0.0
    %1233 = vmatmul.mubr.f32.gmra.mxu0 %v1095
    %v1234 = vpop.f32.mrf.mxu0
    %v1235 = vadd.f32 0.0, %v1234
    %v1236 = vpop.f32.mrf.mxu0
    %1237 = vdwg.mxu0
    %1238 = vmatprep.subr.mxu0 %v126
    %1239 = vmatpush1.msra.mxu0 %v125
    %1240 = vmatprep.subr.mxu0 %v123
    %1241 = vmatpush1.msra.mxu0 %v122
    %1242 = vmatprep.subr.mxu0 %v120
    %1243 = vmatpush1.msra.mxu0 %v119
    %1244 = vmatprep.subr.mxu0 %v117
    %1245 = vmatpush1.msra.mxu0 %v116
    %1246 = vmatprep.subr.mxu0 %v114
    %1247 = vmatpush1.msra.mxu0 %v113
    %1248 = vmatprep.subr.mxu0 %v111
    %1249 = vmatpush1.msra.mxu0 %v110
    %1250 = vmatprep.subr.mxu0 %v108
    %1251 = vmatpush1.msra.mxu0 %v107
    %1252 = vmatprep.subr.mxu0 %v105
    %1253 = vmatpush1.msra.mxu0 %v104
    %1254 = vmatprep.subr.mxu0 %v102
    %1255 = vmatpush1.msra.mxu0 %v101
    %1256 = vmatprep.subr.mxu0 %v99
    %1257 = vmatpush1.msra.mxu0 %v98
    %1258 = vmatprep.subr.mxu0 %v96
    %1259 = vmatpush1.msra.mxu0 %v95
    %1260 = vmatprep.subr.mxu0 %v93
    %1261 = vmatpush1.msra.mxu0 %v92
    %1262 = vmatprep.subr.mxu0 %v90
    %1263 = vmatpush1.msra.mxu0 %v89
    %1264 = vmatprep.subr.mxu0 %v87
    %1265 = vmatpush1.msra.mxu0 %v86
    %1266 = vmatprep.subr.mxu0 %v84
    %1267 = vmatpush1.msra.mxu0 %v83
    %1268 = vmatprep.subr.mxu0 %v81
    %1269 = vmatpush1.msra.mxu0 %v80
    %1270 = vmatprep.subr.mxu0 0.0
    %1271 = vmatpush2.msra.mxu0 0.0
    %1272 = vmatprep.subr.mxu0 0.0
    %1273 = vmatpush2.msra.mxu0 0.0
    %1274 = vmatprep.subr.mxu0 0.0
    %1275 = vmatpush2.msra.mxu0 0.0
    %1276 = vmatprep.subr.mxu0 0.0
    %1277 = vmatpush2.msra.mxu0 0.0
    %1278 = vmatprep.subr.mxu0 0.0
    %1279 = vmatpush2.msra.mxu0 0.0
    %1280 = vmatprep.subr.mxu0 0.0
    %1281 = vmatpush2.msra.mxu0 0.0
    %1282 = vmatprep.subr.mxu0 0.0
    %1283 = vmatpush2.msra.mxu0 0.0
    %1284 = vmatprep.subr.mxu0 0.0
    %1285 = vmatpush2.msra.mxu0 0.0
    %1286 = vmatprep.subr.mxu0 0.0
    %1287 = vmatpush2.msra.mxu0 0.0
    %1288 = vmatprep.subr.mxu0 0.0
    %1289 = vmatpush2.msra.mxu0 0.0
    %1290 = vmatprep.subr.mxu0 0.0
    %1291 = vmatpush2.msra.mxu0 0.0
    %1292 = vmatprep.subr.mxu0 0.0
    %1293 = vmatpush2.msra.mxu0 0.0
    %1294 = vmatprep.subr.mxu0 0.0
    %1295 = vmatpush2.msra.mxu0 0.0
    %1296 = vmatprep.subr.mxu0 0.0
    %1297 = vmatpush2.msra.mxu0 0.0
    %1298 = vmatprep.subr.mxu0 0.0
    %1299 = vmatpush2.msra.mxu0 0.0
    %1300 = vmatprep.subr.mxu0 0.0
    %1301 = vmatpush2.msra.mxu0 0.0
    %1302 = vmatprep.mubr.f32.mxu0 0.0
    %1303 = vmatmul.mubr.f32.gmra.mxu0 %v1091
    %v1304 = vpop.f32.mrf.mxu0
    %v1305 = vadd.f32 0.0, %v1304
    %v1306 = vpop.f32.mrf.mxu0
    %v1307 = vadd.f32 0.0, %v1306
    %1308 = vdwg.mxu0
    %1309 = vmatprep.subr.mxu0 0.0
    %1310 = vmatpush1.msra.mxu0 %v127
    %1311 = vmatprep.subr.mxu0 0.0
    %1312 = vmatpush1.msra.mxu0 %v124
    %1313 = vmatprep.subr.mxu0 0.0
    %1314 = vmatpush1.msra.mxu0 %v121
    %1315 = vmatprep.subr.mxu0 0.0
    %1316 = vmatpush1.msra.mxu0 %v118
    %1317 = vmatprep.subr.mxu0 0.0
    %1318 = vmatpush1.msra.mxu0 %v115
    %1319 = vmatprep.subr.mxu0 0.0
    %1320 = vmatpush1.msra.mxu0 %v112
    %1321 = vmatprep.subr.mxu0 0.0
    %1322 = vmatpush1.msra.mxu0 %v109
    %1323 = vmatprep.subr.mxu0 0.0
    %1324 = vmatpush1.msra.mxu0 %v106
    %1325 = vmatprep.subr.mxu0 0.0
    %1326 = vmatpush1.msra.mxu0 %v103
    %1327 = vmatprep.subr.mxu0 0.0
    %1328 = vmatpush1.msra.mxu0 %v100
    %1329 = vmatprep.subr.mxu0 0.0
    %1330 = vmatpush1.msra.mxu0 %v97
    %1331 = vmatprep.subr.mxu0 0.0
    %1332 = vmatpush1.msra.mxu0 %v94
    %1333 = vmatprep.subr.mxu0 0.0
    %1334 = vmatpush1.msra.mxu0 %v91
    %1335 = vmatprep.subr.mxu0 0.0
    %1336 = vmatpush1.msra.mxu0 %v88
    %1337 = vmatprep.subr.mxu0 0.0
    %1338 = vmatpush1.msra.mxu0 %v85
    %1339 = vmatprep.subr.mxu0 0.0
    %1340 = vmatpush1.msra.mxu0 %v82
    %1341 = vmatprep.subr.mxu0 0.0
    %1342 = vmatpush2.msra.mxu0 0.0
    %1343 = vmatprep.subr.mxu0 0.0
    %1344 = vmatpush2.msra.mxu0 0.0
    %1345 = vmatprep.subr.mxu0 0.0
    %1346 = vmatpush2.msra.mxu0 0.0
    %1347 = vmatprep.subr.mxu0 0.0
    %1348 = vmatpush2.msra.mxu0 0.0
    %1349 = vmatprep.subr.mxu0 0.0
    %1350 = vmatpush2.msra.mxu0 0.0
    %1351 = vmatprep.subr.mxu0 0.0
    %1352 = vmatpush2.msra.mxu0 0.0
    %1353 = vmatprep.subr.mxu0 0.0
    %1354 = vmatpush2.msra.mxu0 0.0
    %1355 = vmatprep.subr.mxu0 0.0
    %1356 = vmatpush2.msra.mxu0 0.0
    %1357 = vmatprep.subr.mxu0 0.0
    %1358 = vmatpush2.msra.mxu0 0.0
    %1359 = vmatprep.subr.mxu0 0.0
    %1360 = vmatpush2.msra.mxu0 0.0
    %1361 = vmatprep.subr.mxu0 0.0
    %1362 = vmatpush2.msra.mxu0 0.0
    %1363 = vmatprep.subr.mxu0 0.0
    %1364 = vmatpush2.msra.mxu0 0.0
    %1365 = vmatprep.subr.mxu0 0.0
    %1366 = vmatpush2.msra.mxu0 0.0
    %1367 = vmatprep.subr.mxu0 0.0
    %1368 = vmatpush2.msra.mxu0 0.0
    %1369 = vmatprep.subr.mxu0 0.0
    %1370 = vmatpush2.msra.mxu0 0.0
    %1371 = vmatprep.subr.mxu0 0.0
    %1372 = vmatpush2.msra.mxu0 0.0
    %1373 = vmatprep.mubr.f32.mxu0 0.0
    %1374 = vmatmul.mubr.f32.gmra.mxu0 %v1091
    %v1375 = vpop.f32.mrf.mxu0
    %v1376 = vadd.f32 0.0, %v1375
    %v1377 = vpop.f32.mrf.mxu0
    %1378 = vdwg.mxu0
    %v1379 = vadd.f32 %v1164, %v1305
    %v1380 = vadd.f32 %v1379, %v424
    %v1381 = vxor.u32 %v1380, 2147483648
    %v1382 = vmul.f32 %v1381, 1.442695
    %v1383 = vpow.pop %v1382
    %v1384 = vadd.f32 %v1383, 1.0
    %v1385 = vrcp.pop %v1384
    %v1386 = vmul.f32 1.0, %v1385
    %v1387 = vadd.f32 %v1166, %v1307
    %v1388 = vadd.f32 %v1387, %v438
    %v1389 = vxor.u32 %v1388, 2147483648
    %v1390 = vmul.f32 %v1389, 1.442695
    %v1391 = vpow.pop %v1390
    %v1392 = vadd.f32 %v1391, 1.0
    %v1393 = vrcp.pop %v1392
    %v1394 = vmul.f32 1.0, %v1393
    %v1395 = vadd.f32 %v1235, %v451
    %v1396 = vadd.f32 %v1376, %v458
    %v1397 = vmul.f32 %v1386, %v1396
    %v1398 = vadd.f32 %v1395, %v1397
    %v1399 = vtanh.pop %v1398
    %v1400 = vsub.f32 1.0, %v1394
    %v1401 = vmul.f32 %v1400, %v1399
    %v1402 = vmul.f32 %v1394, %v1091
    %v1403 = vadd.f32 %v1401, %v1402
    %s1404 = scalar_lea.vmem [#allocation2], 8
    %v1405 = vld [vmem:[%s1404] sm:$0x3]
    %v1407 = vsel %vm133, %v1405, 0
    %1409 = vmatprep.subr.mxu0 0.0
    %1410 = vmatpush1.msra.mxu0 0.0
    %1411 = vmatprep.subr.mxu0 0.0
    %1412 = vmatpush1.msra.mxu0 0.0
    %1413 = vmatprep.subr.mxu0 0.0
    %1414 = vmatpush1.msra.mxu0 0.0
    %1415 = vmatprep.subr.mxu0 0.0
    %1416 = vmatpush1.msra.mxu0 0.0
    %1417 = vmatprep.subr.mxu0 0.0
    %1418 = vmatpush1.msra.mxu0 0.0
    %1419 = vmatprep.subr.mxu0 0.0
    %1420 = vmatpush1.msra.mxu0 0.0
    %1421 = vmatprep.subr.mxu0 0.0
    %1422 = vmatpush1.msra.mxu0 0.0
    %1423 = vmatprep.subr.mxu0 0.0
    %1424 = vmatpush1.msra.mxu0 0.0
    %1425 = vmatprep.subr.mxu0 0.0
    %1426 = vmatpush1.msra.mxu0 0.0
    %1427 = vmatprep.subr.mxu0 0.0
    %1428 = vmatpush1.msra.mxu0 0.0
    %1429 = vmatprep.subr.mxu0 0.0
    %1430 = vmatpush1.msra.mxu0 0.0
    %1431 = vmatprep.subr.mxu0 0.0
    %1432 = vmatpush1.msra.mxu0 0.0
    %1433 = vmatprep.subr.mxu0 %v78
    %1434 = vmatpush1.msra.mxu0 %v77
    %1435 = vmatprep.subr.mxu0 %v75
    %1436 = vmatpush1.msra.mxu0 %v74
    %1437 = vmatprep.subr.mxu0 %v72
    %1438 = vmatpush1.msra.mxu0 %v71
    %1439 = vmatprep.subr.mxu0 %v69
    %1440 = vmatpush1.msra.mxu0 %v68
    %1441 = vmatprep.subr.mxu0 0.0
    %1442 = vmatpush2.msra.mxu0 0.0
    %1443 = vmatprep.subr.mxu0 0.0
    %1444 = vmatpush2.msra.mxu0 0.0
    %1445 = vmatprep.subr.mxu0 0.0
    %1446 = vmatpush2.msra.mxu0 0.0
    %1447 = vmatprep.subr.mxu0 0.0
    %1448 = vmatpush2.msra.mxu0 0.0
    %1449 = vmatprep.subr.mxu0 0.0
    %1450 = vmatpush2.msra.mxu0 0.0
    %1451 = vmatprep.subr.mxu0 0.0
    %1452 = vmatpush2.msra.mxu0 0.0
    %1453 = vmatprep.subr.mxu0 0.0
    %1454 = vmatpush2.msra.mxu0 0.0
    %1455 = vmatprep.subr.mxu0 0.0
    %1456 = vmatpush2.msra.mxu0 0.0
    %1457 = vmatprep.subr.mxu0 0.0
    %1458 = vmatpush2.msra.mxu0 0.0
    %1459 = vmatprep.subr.mxu0 0.0
    %1460 = vmatpush2.msra.mxu0 0.0
    %1461 = vmatprep.subr.mxu0 0.0
    %1462 = vmatpush2.msra.mxu0 0.0
    %1463 = vmatprep.subr.mxu0 0.0
    %1464 = vmatpush2.msra.mxu0 0.0
    %1465 = vmatprep.subr.mxu0 0.0
    %1466 = vmatpush2.msra.mxu0 0.0
    %1467 = vmatprep.subr.mxu0 0.0
    %1468 = vmatpush2.msra.mxu0 0.0
    %1469 = vmatprep.subr.mxu0 0.0
    %1470 = vmatpush2.msra.mxu0 0.0
    %1471 = vmatprep.subr.mxu0 0.0
    %1472 = vmatpush2.msra.mxu0 0.0
    %1473 = vmatprep.mubr.f32.mxu0 0.0
    %1474 = vmatmul.mubr.f32.gmra.mxu0 %v1407
    %v1475 = vpop.f32.mrf.mxu0
    %v1476 = vadd.f32 0.0, %v1475
    %v1477 = vpop.f32.mrf.mxu0
    %v1478 = vadd.f32 0.0, %v1477
    %1479 = vdwg.mxu0
    %1480 = vmatprep.subr.mxu0 0.0
    %1481 = vmatpush1.msra.mxu0 0.0
    %1482 = vmatprep.subr.mxu0 0.0
    %1483 = vmatpush1.msra.mxu0 0.0
    %1484 = vmatprep.subr.mxu0 0.0
    %1485 = vmatpush1.msra.mxu0 0.0
    %1486 = vmatprep.subr.mxu0 0.0
    %1487 = vmatpush1.msra.mxu0 0.0
    %1488 = vmatprep.subr.mxu0 0.0
    %1489 = vmatpush1.msra.mxu0 0.0
    %1490 = vmatprep.subr.mxu0 0.0
    %1491 = vmatpush1.msra.mxu0 0.0
    %1492 = vmatprep.subr.mxu0 0.0
    %1493 = vmatpush1.msra.mxu0 0.0
    %1494 = vmatprep.subr.mxu0 0.0
    %1495 = vmatpush1.msra.mxu0 0.0
    %1496 = vmatprep.subr.mxu0 0.0
    %1497 = vmatpush1.msra.mxu0 0.0
    %1498 = vmatprep.subr.mxu0 0.0
    %1499 = vmatpush1.msra.mxu0 0.0
    %1500 = vmatprep.subr.mxu0 0.0
    %1501 = vmatpush1.msra.mxu0 0.0
    %1502 = vmatprep.subr.mxu0 0.0
    %1503 = vmatpush1.msra.mxu0 0.0
    %1504 = vmatprep.subr.mxu0 0.0
    %1505 = vmatpush1.msra.mxu0 %v79
    %1506 = vmatprep.subr.mxu0 0.0
    %1507 = vmatpush1.msra.mxu0 %v76
    %1508 = vmatprep.subr.mxu0 0.0
    %1509 = vmatpush1.msra.mxu0 %v73
    %1510 = vmatprep.subr.mxu0 0.0
    %1511 = vmatpush1.msra.mxu0 %v70
    %1512 = vmatprep.subr.mxu0 0.0
    %1513 = vmatpush2.msra.mxu0 0.0
    %1514 = vmatprep.subr.mxu0 0.0
    %1515 = vmatpush2.msra.mxu0 0.0
    %1516 = vmatprep.subr.mxu0 0.0
    %1517 = vmatpush2.msra.mxu0 0.0
    %1518 = vmatprep.subr.mxu0 0.0
    %1519 = vmatpush2.msra.mxu0 0.0
    %1520 = vmatprep.subr.mxu0 0.0
    %1521 = vmatpush2.msra.mxu0 0.0
    %1522 = vmatprep.subr.mxu0 0.0
    %1523 = vmatpush2.msra.mxu0 0.0
    %1524 = vmatprep.subr.mxu0 0.0
    %1525 = vmatpush2.msra.mxu0 0.0
    %1526 = vmatprep.subr.mxu0 0.0
    %1527 = vmatpush2.msra.mxu0 0.0
    %1528 = vmatprep.subr.mxu0 0.0
    %1529 = vmatpush2.msra.mxu0 0.0
    %1530 = vmatprep.subr.mxu0 0.0
    %1531 = vmatpush2.msra.mxu0 0.0
    %1532 = vmatprep.subr.mxu0 0.0
    %1533 = vmatpush2.msra.mxu0 0.0
    %1534 = vmatprep.subr.mxu0 0.0
    %1535 = vmatpush2.msra.mxu0 0.0
    %1536 = vmatprep.subr.mxu0 0.0
    %1537 = vmatpush2.msra.mxu0 0.0
    %1538 = vmatprep.subr.mxu0 0.0
    %1539 = vmatpush2.msra.mxu0 0.0
    %1540 = vmatprep.subr.mxu0 0.0
    %1541 = vmatpush2.msra.mxu0 0.0
    %1542 = vmatprep.subr.mxu0 0.0
    %1543 = vmatpush2.msra.mxu0 0.0
    %1544 = vmatprep.mubr.f32.mxu0 0.0
    %1545 = vmatmul.mubr.f32.gmra.mxu0 %v1407
    %v1546 = vpop.f32.mrf.mxu0
    %v1547 = vadd.f32 0.0, %v1546
    %v1548 = vpop.f32.mrf.mxu0
    %1549 = vdwg.mxu0
    %1550 = vmatprep.subr.mxu0 %v126
    %1551 = vmatpush1.msra.mxu0 %v125
    %1552 = vmatprep.subr.mxu0 %v123
    %1553 = vmatpush1.msra.mxu0 %v122
    %1554 = vmatprep.subr.mxu0 %v120
    %1555 = vmatpush1.msra.mxu0 %v119
    %1556 = vmatprep.subr.mxu0 %v117
    %1557 = vmatpush1.msra.mxu0 %v116
    %1558 = vmatprep.subr.mxu0 %v114
    %1559 = vmatpush1.msra.mxu0 %v113
    %1560 = vmatprep.subr.mxu0 %v111
    %1561 = vmatpush1.msra.mxu0 %v110
    %1562 = vmatprep.subr.mxu0 %v108
    %1563 = vmatpush1.msra.mxu0 %v107
    %1564 = vmatprep.subr.mxu0 %v105
    %1565 = vmatpush1.msra.mxu0 %v104
    %1566 = vmatprep.subr.mxu0 %v102
    %1567 = vmatpush1.msra.mxu0 %v101
    %1568 = vmatprep.subr.mxu0 %v99
    %1569 = vmatpush1.msra.mxu0 %v98
    %1570 = vmatprep.subr.mxu0 %v96
    %1571 = vmatpush1.msra.mxu0 %v95
    %1572 = vmatprep.subr.mxu0 %v93
    %1573 = vmatpush1.msra.mxu0 %v92
    %1574 = vmatprep.subr.mxu0 %v90
    %1575 = vmatpush1.msra.mxu0 %v89
    %1576 = vmatprep.subr.mxu0 %v87
    %1577 = vmatpush1.msra.mxu0 %v86
    %1578 = vmatprep.subr.mxu0 %v84
    %1579 = vmatpush1.msra.mxu0 %v83
    %1580 = vmatprep.subr.mxu0 %v81
    %1581 = vmatpush1.msra.mxu0 %v80
    %1582 = vmatprep.subr.mxu0 0.0
    %1583 = vmatpush2.msra.mxu0 0.0
    %1584 = vmatprep.subr.mxu0 0.0
    %1585 = vmatpush2.msra.mxu0 0.0
    %1586 = vmatprep.subr.mxu0 0.0
    %1587 = vmatpush2.msra.mxu0 0.0
    %1588 = vmatprep.subr.mxu0 0.0
    %1589 = vmatpush2.msra.mxu0 0.0
    %1590 = vmatprep.subr.mxu0 0.0
    %1591 = vmatpush2.msra.mxu0 0.0
    %1592 = vmatprep.subr.mxu0 0.0
    %1593 = vmatpush2.msra.mxu0 0.0
    %1594 = vmatprep.subr.mxu0 0.0
    %1595 = vmatpush2.msra.mxu0 0.0
    %1596 = vmatprep.subr.mxu0 0.0
    %1597 = vmatpush2.msra.mxu0 0.0
    %1598 = vmatprep.subr.mxu0 0.0
    %1599 = vmatpush2.msra.mxu0 0.0
    %1600 = vmatprep.subr.mxu0 0.0
    %1601 = vmatpush2.msra.mxu0 0.0
    %1602 = vmatprep.subr.mxu0 0.0
    %1603 = vmatpush2.msra.mxu0 0.0
    %1604 = vmatprep.subr.mxu0 0.0
    %1605 = vmatpush2.msra.mxu0 0.0
    %1606 = vmatprep.subr.mxu0 0.0
    %1607 = vmatpush2.msra.mxu0 0.0
    %1608 = vmatprep.subr.mxu0 0.0
    %1609 = vmatpush2.msra.mxu0 0.0
    %1610 = vmatprep.subr.mxu0 0.0
    %1611 = vmatpush2.msra.mxu0 0.0
    %1612 = vmatprep.subr.mxu0 0.0
    %1613 = vmatpush2.msra.mxu0 0.0
    %1614 = vmatprep.mubr.f32.mxu0 0.0
    %1615 = vmatmul.mubr.f32.gmra.mxu0 %v1403
    %v1616 = vpop.f32.mrf.mxu0
    %v1617 = vadd.f32 0.0, %v1616
    %v1618 = vpop.f32.mrf.mxu0
    %v1619 = vadd.f32 0.0, %v1618
    %1620 = vdwg.mxu0
    %1621 = vmatprep.subr.mxu0 0.0
    %1622 = vmatpush1.msra.mxu0 %v127
    %1623 = vmatprep.subr.mxu0 0.0
    %1624 = vmatpush1.msra.mxu0 %v124
    %1625 = vmatprep.subr.mxu0 0.0
    %1626 = vmatpush1.msra.mxu0 %v121
    %1627 = vmatprep.subr.mxu0 0.0
    %1628 = vmatpush1.msra.mxu0 %v118
    %1629 = vmatprep.subr.mxu0 0.0
    %1630 = vmatpush1.msra.mxu0 %v115
    %1631 = vmatprep.subr.mxu0 0.0
    %1632 = vmatpush1.msra.mxu0 %v112
    %1633 = vmatprep.subr.mxu0 0.0
    %1634 = vmatpush1.msra.mxu0 %v109
    %1635 = vmatprep.subr.mxu0 0.0
    %1636 = vmatpush1.msra.mxu0 %v106
    %1637 = vmatprep.subr.mxu0 0.0
    %1638 = vmatpush1.msra.mxu0 %v103
    %1639 = vmatprep.subr.mxu0 0.0
    %1640 = vmatpush1.msra.mxu0 %v100
    %1641 = vmatprep.subr.mxu0 0.0
    %1642 = vmatpush1.msra.mxu0 %v97
    %1643 = vmatprep.subr.mxu0 0.0
    %1644 = vmatpush1.msra.mxu0 %v94
    %1645 = vmatprep.subr.mxu0 0.0
    %1646 = vmatpush1.msra.mxu0 %v91
    %1647 = vmatprep.subr.mxu0 0.0
    %1648 = vmatpush1.msra.mxu0 %v88
    %1649 = vmatprep.subr.mxu0 0.0
    %1650 = vmatpush1.msra.mxu0 %v85
    %1651 = vmatprep.subr.mxu0 0.0
    %1652 = vmatpush1.msra.mxu0 %v82
    %1653 = vmatprep.subr.mxu0 0.0
    %1654 = vmatpush2.msra.mxu0 0.0
    %1655 = vmatprep.subr.mxu0 0.0
    %1656 = vmatpush2.msra.mxu0 0.0
    %1657 = vmatprep.subr.mxu0 0.0
    %1658 = vmatpush2.msra.mxu0 0.0
    %1659 = vmatprep.subr.mxu0 0.0
    %1660 = vmatpush2.msra.mxu0 0.0
    %1661 = vmatprep.subr.mxu0 0.0
    %1662 = vmatpush2.msra.mxu0 0.0
    %1663 = vmatprep.subr.mxu0 0.0
    %1664 = vmatpush2.msra.mxu0 0.0
    %1665 = vmatprep.subr.mxu0 0.0
    %1666 = vmatpush2.msra.mxu0 0.0
    %1667 = vmatprep.subr.mxu0 0.0
    %1668 = vmatpush2.msra.mxu0 0.0
    %1669 = vmatprep.subr.mxu0 0.0
    %1670 = vmatpush2.msra.mxu0 0.0
    %1671 = vmatprep.subr.mxu0 0.0
    %1672 = vmatpush2.msra.mxu0 0.0
    %1673 = vmatprep.subr.mxu0 0.0
    %1674 = vmatpush2.msra.mxu0 0.0
    %1675 = vmatprep.subr.mxu0 0.0
    %1676 = vmatpush2.msra.mxu0 0.0
    %1677 = vmatprep.subr.mxu0 0.0
    %1678 = vmatpush2.msra.mxu0 0.0
    %1679 = vmatprep.subr.mxu0 0.0
    %1680 = vmatpush2.msra.mxu0 0.0
    %1681 = vmatprep.subr.mxu0 0.0
    %1682 = vmatpush2.msra.mxu0 0.0
    %1683 = vmatprep.subr.mxu0 0.0
    %1684 = vmatpush2.msra.mxu0 0.0
    %1685 = vmatprep.mubr.f32.mxu0 0.0
    %1686 = vmatmul.mubr.f32.gmra.mxu0 %v1403
    %v1687 = vpop.f32.mrf.mxu0
    %v1688 = vadd.f32 0.0, %v1687
    %v1689 = vpop.f32.mrf.mxu0
    %1690 = vdwg.mxu0
    %v1691 = vadd.f32 %v1476, %v1617
    %v1692 = vadd.f32 %v1691, %v424
    %v1693 = vxor.u32 %v1692, 2147483648
    %v1694 = vmul.f32 %v1693, 1.442695
    %v1695 = vpow.pop %v1694
    %v1696 = vadd.f32 %v1695, 1.0
    %v1697 = vrcp.pop %v1696
    %v1698 = vmul.f32 1.0, %v1697
    %v1699 = vadd.f32 %v1478, %v1619
    %v1700 = vadd.f32 %v1699, %v438
    %v1701 = vxor.u32 %v1700, 2147483648
    %v1702 = vmul.f32 %v1701, 1.442695
    %v1703 = vpow.pop %v1702
    %v1704 = vadd.f32 %v1703, 1.0
    %v1705 = vrcp.pop %v1704
    %v1706 = vmul.f32 1.0, %v1705
    %v1707 = vadd.f32 %v1547, %v451
    %v1708 = vadd.f32 %v1688, %v458
    %v1709 = vmul.f32 %v1698, %v1708
    %v1710 = vadd.f32 %v1707, %v1709
    %v1711 = vtanh.pop %v1710
    %v1712 = vsub.f32 1.0, %v1706
    %v1713 = vmul.f32 %v1712, %v1711
    %v1714 = vmul.f32 %v1706, %v1403
    %v1715 = vadd.f32 %v1713, %v1714
    %s1716 = scalar_lea.vmem [#allocation2], 10
    %v1717 = vld [vmem:[%s1716] sm:$0x3]
    %v1719 = vsel %vm133, %v1717, 0
    %1721 = vmatprep.subr.mxu0 0.0
    %1722 = vmatpush1.msra.mxu0 0.0
    %1723 = vmatprep.subr.mxu0 0.0
    %1724 = vmatpush1.msra.mxu0 0.0
    %1725 = vmatprep.subr.mxu0 0.0
    %1726 = vmatpush1.msra.mxu0 0.0
    %1727 = vmatprep.subr.mxu0 0.0
    %1728 = vmatpush1.msra.mxu0 0.0
    %1729 = vmatprep.subr.mxu0 0.0
    %1730 = vmatpush1.msra.mxu0 0.0
    %1731 = vmatprep.subr.mxu0 0.0
    %1732 = vmatpush1.msra.mxu0 0.0
    %1733 = vmatprep.subr.mxu0 0.0
    %1734 = vmatpush1.msra.mxu0 0.0
    %1735 = vmatprep.subr.mxu0 0.0
    %1736 = vmatpush1.msra.mxu0 0.0
    %1737 = vmatprep.subr.mxu0 0.0
    %1738 = vmatpush1.msra.mxu0 0.0
    %1739 = vmatprep.subr.mxu0 0.0
    %1740 = vmatpush1.msra.mxu0 0.0
    %1741 = vmatprep.subr.mxu0 0.0
    %1742 = vmatpush1.msra.mxu0 0.0
    %1743 = vmatprep.subr.mxu0 0.0
    %1744 = vmatpush1.msra.mxu0 0.0
    %1745 = vmatprep.subr.mxu0 %v78
    %1746 = vmatpush1.msra.mxu0 %v77
    %1747 = vmatprep.subr.mxu0 %v75
    %1748 = vmatpush1.msra.mxu0 %v74
    %1749 = vmatprep.subr.mxu0 %v72
    %1750 = vmatpush1.msra.mxu0 %v71
    %1751 = vmatprep.subr.mxu0 %v69
    %1752 = vmatpush1.msra.mxu0 %v68
    %1753 = vmatprep.subr.mxu0 0.0
    %1754 = vmatpush2.msra.mxu0 0.0
    %1755 = vmatprep.subr.mxu0 0.0
    %1756 = vmatpush2.msra.mxu0 0.0
    %1757 = vmatprep.subr.mxu0 0.0
    %1758 = vmatpush2.msra.mxu0 0.0
    %1759 = vmatprep.subr.mxu0 0.0
    %1760 = vmatpush2.msra.mxu0 0.0
    %1761 = vmatprep.subr.mxu0 0.0
    %1762 = vmatpush2.msra.mxu0 0.0
    %1763 = vmatprep.subr.mxu0 0.0
    %1764 = vmatpush2.msra.mxu0 0.0
    %1765 = vmatprep.subr.mxu0 0.0
    %1766 = vmatpush2.msra.mxu0 0.0
    %1767 = vmatprep.subr.mxu0 0.0
    %1768 = vmatpush2.msra.mxu0 0.0
    %1769 = vmatprep.subr.mxu0 0.0
    %1770 = vmatpush2.msra.mxu0 0.0
    %1771 = vmatprep.subr.mxu0 0.0
    %1772 = vmatpush2.msra.mxu0 0.0
    %1773 = vmatprep.subr.mxu0 0.0
    %1774 = vmatpush2.msra.mxu0 0.0
    %1775 = vmatprep.subr.mxu0 0.0
    %1776 = vmatpush2.msra.mxu0 0.0
    %1777 = vmatprep.subr.mxu0 0.0
    %1778 = vmatpush2.msra.mxu0 0.0
    %1779 = vmatprep.subr.mxu0 0.0
    %1780 = vmatpush2.msra.mxu0 0.0
    %1781 = vmatprep.subr.mxu0 0.0
    %1782 = vmatpush2.msra.mxu0 0.0
    %1783 = vmatprep.subr.mxu0 0.0
    %1784 = vmatpush2.msra.mxu0 0.0
    %1785 = vmatprep.mubr.f32.mxu0 0.0
    %1786 = vmatmul.mubr.f32.gmra.mxu0 %v1719
    %v1787 = vpop.f32.mrf.mxu0
    %v1788 = vadd.f32 0.0, %v1787
    %v1789 = vpop.f32.mrf.mxu0
    %v1790 = vadd.f32 0.0, %v1789
    %1791 = vdwg.mxu0
    %1792 = vmatprep.subr.mxu0 0.0
    %1793 = vmatpush1.msra.mxu0 0.0
    %1794 = vmatprep.subr.mxu0 0.0
    %1795 = vmatpush1.msra.mxu0 0.0
    %1796 = vmatprep.subr.mxu0 0.0
    %1797 = vmatpush1.msra.mxu0 0.0
    %1798 = vmatprep.subr.mxu0 0.0
    %1799 = vmatpush1.msra.mxu0 0.0
    %1800 = vmatprep.subr.mxu0 0.0
    %1801 = vmatpush1.msra.mxu0 0.0
    %1802 = vmatprep.subr.mxu0 0.0
    %1803 = vmatpush1.msra.mxu0 0.0
    %1804 = vmatprep.subr.mxu0 0.0
    %1805 = vmatpush1.msra.mxu0 0.0
    %1806 = vmatprep.subr.mxu0 0.0
    %1807 = vmatpush1.msra.mxu0 0.0
    %1808 = vmatprep.subr.mxu0 0.0
    %1809 = vmatpush1.msra.mxu0 0.0
    %1810 = vmatprep.subr.mxu0 0.0
    %1811 = vmatpush1.msra.mxu0 0.0
    %1812 = vmatprep.subr.mxu0 0.0
    %1813 = vmatpush1.msra.mxu0 0.0
    %1814 = vmatprep.subr.mxu0 0.0
    %1815 = vmatpush1.msra.mxu0 0.0
    %1816 = vmatprep.subr.mxu0 0.0
    %1817 = vmatpush1.msra.mxu0 %v79
    %1818 = vmatprep.subr.mxu0 0.0
    %1819 = vmatpush1.msra.mxu0 %v76
    %1820 = vmatprep.subr.mxu0 0.0
    %1821 = vmatpush1.msra.mxu0 %v73
    %1822 = vmatprep.subr.mxu0 0.0
    %1823 = vmatpush1.msra.mxu0 %v70
    %1824 = vmatprep.subr.mxu0 0.0
    %1825 = vmatpush2.msra.mxu0 0.0
    %1826 = vmatprep.subr.mxu0 0.0
    %1827 = vmatpush2.msra.mxu0 0.0
    %1828 = vmatprep.subr.mxu0 0.0
    %1829 = vmatpush2.msra.mxu0 0.0
    %1830 = vmatprep.subr.mxu0 0.0
    %1831 = vmatpush2.msra.mxu0 0.0
    %1832 = vmatprep.subr.mxu0 0.0
    %1833 = vmatpush2.msra.mxu0 0.0
    %1834 = vmatprep.subr.mxu0 0.0
    %1835 = vmatpush2.msra.mxu0 0.0
    %1836 = vmatprep.subr.mxu0 0.0
    %1837 = vmatpush2.msra.mxu0 0.0
    %1838 = vmatprep.subr.mxu0 0.0
    %1839 = vmatpush2.msra.mxu0 0.0
    %1840 = vmatprep.subr.mxu0 0.0
    %1841 = vmatpush2.msra.mxu0 0.0
    %1842 = vmatprep.subr.mxu0 0.0
    %1843 = vmatpush2.msra.mxu0 0.0
    %1844 = vmatprep.subr.mxu0 0.0
    %1845 = vmatpush2.msra.mxu0 0.0
    %1846 = vmatprep.subr.mxu0 0.0
    %1847 = vmatpush2.msra.mxu0 0.0
    %1848 = vmatprep.subr.mxu0 0.0
    %1849 = vmatpush2.msra.mxu0 0.0
    %1850 = vmatprep.subr.mxu0 0.0
    %1851 = vmatpush2.msra.mxu0 0.0
    %1852 = vmatprep.subr.mxu0 0.0
    %1853 = vmatpush2.msra.mxu0 0.0
    %1854 = vmatprep.subr.mxu0 0.0
    %1855 = vmatpush2.msra.mxu0 0.0
    %1856 = vmatprep.mubr.f32.mxu0 0.0
    %1857 = vmatmul.mubr.f32.gmra.mxu0 %v1719
    %v1858 = vpop.f32.mrf.mxu0
    %v1859 = vadd.f32 0.0, %v1858
    %v1860 = vpop.f32.mrf.mxu0
    %1861 = vdwg.mxu0
    %1862 = vmatprep.subr.mxu0 %v126
    %1863 = vmatpush1.msra.mxu0 %v125
    %1864 = vmatprep.subr.mxu0 %v123
    %1865 = vmatpush1.msra.mxu0 %v122
    %1866 = vmatprep.subr.mxu0 %v120
    %1867 = vmatpush1.msra.mxu0 %v119
    %1868 = vmatprep.subr.mxu0 %v117
    %1869 = vmatpush1.msra.mxu0 %v116
    %1870 = vmatprep.subr.mxu0 %v114
    %1871 = vmatpush1.msra.mxu0 %v113
    %1872 = vmatprep.subr.mxu0 %v111
    %1873 = vmatpush1.msra.mxu0 %v110
    %1874 = vmatprep.subr.mxu0 %v108
    %1875 = vmatpush1.msra.mxu0 %v107
    %1876 = vmatprep.subr.mxu0 %v105
    %1877 = vmatpush1.msra.mxu0 %v104
    %1878 = vmatprep.subr.mxu0 %v102
    %1879 = vmatpush1.msra.mxu0 %v101
    %1880 = vmatprep.subr.mxu0 %v99
    %1881 = vmatpush1.msra.mxu0 %v98
    %1882 = vmatprep.subr.mxu0 %v96
    %1883 = vmatpush1.msra.mxu0 %v95
    %1884 = vmatprep.subr.mxu0 %v93
    %1885 = vmatpush1.msra.mxu0 %v92
    %1886 = vmatprep.subr.mxu0 %v90
    %1887 = vmatpush1.msra.mxu0 %v89
    %1888 = vmatprep.subr.mxu0 %v87
    %1889 = vmatpush1.msra.mxu0 %v86
    %1890 = vmatprep.subr.mxu0 %v84
    %1891 = vmatpush1.msra.mxu0 %v83
    %1892 = vmatprep.subr.mxu0 %v81
    %1893 = vmatpush1.msra.mxu0 %v80
    %1894 = vmatprep.subr.mxu0 0.0
    %1895 = vmatpush2.msra.mxu0 0.0
    %1896 = vmatprep.subr.mxu0 0.0
    %1897 = vmatpush2.msra.mxu0 0.0
    %1898 = vmatprep.subr.mxu0 0.0
    %1899 = vmatpush2.msra.mxu0 0.0
    %1900 = vmatprep.subr.mxu0 0.0
    %1901 = vmatpush2.msra.mxu0 0.0
    %1902 = vmatprep.subr.mxu0 0.0
    %1903 = vmatpush2.msra.mxu0 0.0
    %1904 = vmatprep.subr.mxu0 0.0
    %1905 = vmatpush2.msra.mxu0 0.0
    %1906 = vmatprep.subr.mxu0 0.0
    %1907 = vmatpush2.msra.mxu0 0.0
    %1908 = vmatprep.subr.mxu0 0.0
    %1909 = vmatpush2.msra.mxu0 0.0
    %1910 = vmatprep.subr.mxu0 0.0
    %1911 = vmatpush2.msra.mxu0 0.0
    %1912 = vmatprep.subr.mxu0 0.0
    %1913 = vmatpush2.msra.mxu0 0.0
    %1914 = vmatprep.subr.mxu0 0.0
    %1915 = vmatpush2.msra.mxu0 0.0
    %1916 = vmatprep.subr.mxu0 0.0
    %1917 = vmatpush2.msra.mxu0 0.0
    %1918 = vmatprep.subr.mxu0 0.0
    %1919 = vmatpush2.msra.mxu0 0.0
    %1920 = vmatprep.subr.mxu0 0.0
    %1921 = vmatpush2.msra.mxu0 0.0
    %1922 = vmatprep.subr.mxu0 0.0
    %1923 = vmatpush2.msra.mxu0 0.0
    %1924 = vmatprep.subr.mxu0 0.0
    %1925 = vmatpush2.msra.mxu0 0.0
    %1926 = vmatprep.mubr.f32.mxu0 0.0
    %1927 = vmatmul.mubr.f32.gmra.mxu0 %v1715
    %v1928 = vpop.f32.mrf.mxu0
    %v1929 = vadd.f32 0.0, %v1928
    %v1930 = vpop.f32.mrf.mxu0
    %v1931 = vadd.f32 0.0, %v1930
    %1932 = vdwg.mxu0
    %1933 = vmatprep.subr.mxu0 0.0
    %1934 = vmatpush1.msra.mxu0 %v127
    %1935 = vmatprep.subr.mxu0 0.0
    %1936 = vmatpush1.msra.mxu0 %v124
    %1937 = vmatprep.subr.mxu0 0.0
    %1938 = vmatpush1.msra.mxu0 %v121
    %1939 = vmatprep.subr.mxu0 0.0
    %1940 = vmatpush1.msra.mxu0 %v118
    %1941 = vmatprep.subr.mxu0 0.0
    %1942 = vmatpush1.msra.mxu0 %v115
    %1943 = vmatprep.subr.mxu0 0.0
    %1944 = vmatpush1.msra.mxu0 %v112
    %1945 = vmatprep.subr.mxu0 0.0
    %1946 = vmatpush1.msra.mxu0 %v109
    %1947 = vmatprep.subr.mxu0 0.0
    %1948 = vmatpush1.msra.mxu0 %v106
    %1949 = vmatprep.subr.mxu0 0.0
    %1950 = vmatpush1.msra.mxu0 %v103
    %1951 = vmatprep.subr.mxu0 0.0
    %1952 = vmatpush1.msra.mxu0 %v100
    %1953 = vmatprep.subr.mxu0 0.0
    %1954 = vmatpush1.msra.mxu0 %v97
    %1955 = vmatprep.subr.mxu0 0.0
    %1956 = vmatpush1.msra.mxu0 %v94
    %1957 = vmatprep.subr.mxu0 0.0
    %1958 = vmatpush1.msra.mxu0 %v91
    %1959 = vmatprep.subr.mxu0 0.0
    %1960 = vmatpush1.msra.mxu0 %v88
    %1961 = vmatprep.subr.mxu0 0.0
    %1962 = vmatpush1.msra.mxu0 %v85
    %1963 = vmatprep.subr.mxu0 0.0
    %1964 = vmatpush1.msra.mxu0 %v82
    %1965 = vmatprep.subr.mxu0 0.0
    %1966 = vmatpush2.msra.mxu0 0.0
    %1967 = vmatprep.subr.mxu0 0.0
    %1968 = vmatpush2.msra.mxu0 0.0
    %1969 = vmatprep.subr.mxu0 0.0
    %1970 = vmatpush2.msra.mxu0 0.0
    %1971 = vmatprep.subr.mxu0 0.0
    %1972 = vmatpush2.msra.mxu0 0.0
    %1973 = vmatprep.subr.mxu0 0.0
    %1974 = vmatpush2.msra.mxu0 0.0
    %1975 = vmatprep.subr.mxu0 0.0
    %1976 = vmatpush2.msra.mxu0 0.0
    %1977 = vmatprep.subr.mxu0 0.0
    %1978 = vmatpush2.msra.mxu0 0.0
    %1979 = vmatprep.subr.mxu0 0.0
    %1980 = vmatpush2.msra.mxu0 0.0
    %1981 = vmatprep.subr.mxu0 0.0
    %1982 = vmatpush2.msra.mxu0 0.0
    %1983 = vmatprep.subr.mxu0 0.0
    %1984 = vmatpush2.msra.mxu0 0.0
    %1985 = vmatprep.subr.mxu0 0.0
    %1986 = vmatpush2.msra.mxu0 0.0
    %1987 = vmatprep.subr.mxu0 0.0
    %1988 = vmatpush2.msra.mxu0 0.0
    %1989 = vmatprep.subr.mxu0 0.0
    %1990 = vmatpush2.msra.mxu0 0.0
    %1991 = vmatprep.subr.mxu0 0.0
    %1992 = vmatpush2.msra.mxu0 0.0
    %1993 = vmatprep.subr.mxu0 0.0
    %1994 = vmatpush2.msra.mxu0 0.0
    %1995 = vmatprep.subr.mxu0 0.0
    %1996 = vmatpush2.msra.mxu0 0.0
    %1997 = vmatprep.mubr.f32.mxu0 0.0
    %1998 = vmatmul.mubr.f32.gmra.mxu0 %v1715
    %v1999 = vpop.f32.mrf.mxu0
    %v2000 = vadd.f32 0.0, %v1999
    %v2001 = vpop.f32.mrf.mxu0
    %2002 = vdwg.mxu0
    %v2003 = vadd.f32 %v1788, %v1929
    %v2004 = vadd.f32 %v2003, %v424
    %v2005 = vxor.u32 %v2004, 2147483648
    %v2006 = vmul.f32 %v2005, 1.442695
    %v2007 = vpow.pop %v2006
    %v2008 = vadd.f32 %v2007, 1.0
    %v2009 = vrcp.pop %v2008
    %v2010 = vmul.f32 1.0, %v2009
    %v2011 = vadd.f32 %v1790, %v1931
    %v2012 = vadd.f32 %v2011, %v438
    %v2013 = vxor.u32 %v2012, 2147483648
    %v2014 = vmul.f32 %v2013, 1.442695
    %v2015 = vpow.pop %v2014
    %v2016 = vadd.f32 %v2015, 1.0
    %v2017 = vrcp.pop %v2016
    %v2018 = vmul.f32 1.0, %v2017
    %v2019 = vadd.f32 %v1859, %v451
    %v2020 = vadd.f32 %v2000, %v458
    %v2021 = vmul.f32 %v2010, %v2020
    %v2022 = vadd.f32 %v2019, %v2021
    %v2023 = vtanh.pop %v2022
    %v2024 = vsub.f32 1.0, %v2018
    %v2025 = vmul.f32 %v2024, %v2023
    %v2026 = vmul.f32 %v2018, %v1715
    %v2027 = vadd.f32 %v2025, %v2026
    %s2028 = scalar_lea.vmem [#allocation2], 12
    %v2029 = vld [vmem:[%s2028] sm:$0x3]
    %v2031 = vsel %vm133, %v2029, 0
    %2033 = vmatprep.subr.mxu0 0.0
    %2034 = vmatpush1.msra.mxu0 0.0
    %2035 = vmatprep.subr.mxu0 0.0
    %2036 = vmatpush1.msra.mxu0 0.0
    %2037 = vmatprep.subr.mxu0 0.0
    %2038 = vmatpush1.msra.mxu0 0.0
    %2039 = vmatprep.subr.mxu0 0.0
    %2040 = vmatpush1.msra.mxu0 0.0
    %2041 = vmatprep.subr.mxu0 0.0
    %2042 = vmatpush1.msra.mxu0 0.0
    %2043 = vmatprep.subr.mxu0 0.0
    %2044 = vmatpush1.msra.mxu0 0.0
    %2045 = vmatprep.subr.mxu0 0.0
    %2046 = vmatpush1.msra.mxu0 0.0
    %2047 = vmatprep.subr.mxu0 0.0
    %2048 = vmatpush1.msra.mxu0 0.0
    %2049 = vmatprep.subr.mxu0 0.0
    %2050 = vmatpush1.msra.mxu0 0.0
    %2051 = vmatprep.subr.mxu0 0.0
    %2052 = vmatpush1.msra.mxu0 0.0
    %2053 = vmatprep.subr.mxu0 0.0
    %2054 = vmatpush1.msra.mxu0 0.0
    %2055 = vmatprep.subr.mxu0 0.0
    %2056 = vmatpush1.msra.mxu0 0.0
    %2057 = vmatprep.subr.mxu0 %v78
    %2058 = vmatpush1.msra.mxu0 %v77
    %2059 = vmatprep.subr.mxu0 %v75
    %2060 = vmatpush1.msra.mxu0 %v74
    %2061 = vmatprep.subr.mxu0 %v72
    %2062 = vmatpush1.msra.mxu0 %v71
    %2063 = vmatprep.subr.mxu0 %v69
    %2064 = vmatpush1.msra.mxu0 %v68
    %2065 = vmatprep.subr.mxu0 0.0
    %2066 = vmatpush2.msra.mxu0 0.0
    %2067 = vmatprep.subr.mxu0 0.0
    %2068 = vmatpush2.msra.mxu0 0.0
    %2069 = vmatprep.subr.mxu0 0.0
    %2070 = vmatpush2.msra.mxu0 0.0
    %2071 = vmatprep.subr.mxu0 0.0
    %2072 = vmatpush2.msra.mxu0 0.0
    %2073 = vmatprep.subr.mxu0 0.0
    %2074 = vmatpush2.msra.mxu0 0.0
    %2075 = vmatprep.subr.mxu0 0.0
    %2076 = vmatpush2.msra.mxu0 0.0
    %2077 = vmatprep.subr.mxu0 0.0
    %2078 = vmatpush2.msra.mxu0 0.0
    %2079 = vmatprep.subr.mxu0 0.0
    %2080 = vmatpush2.msra.mxu0 0.0
    %2081 = vmatprep.subr.mxu0 0.0
    %2082 = vmatpush2.msra.mxu0 0.0
    %2083 = vmatprep.subr.mxu0 0.0
    %2084 = vmatpush2.msra.mxu0 0.0
    %2085 = vmatprep.subr.mxu0 0.0
    %2086 = vmatpush2.msra.mxu0 0.0
    %2087 = vmatprep.subr.mxu0 0.0
    %2088 = vmatpush2.msra.mxu0 0.0
    %2089 = vmatprep.subr.mxu0 0.0
    %2090 = vmatpush2.msra.mxu0 0.0
    %2091 = vmatprep.subr.mxu0 0.0
    %2092 = vmatpush2.msra.mxu0 0.0
    %2093 = vmatprep.subr.mxu0 0.0
    %2094 = vmatpush2.msra.mxu0 0.0
    %2095 = vmatprep.subr.mxu0 0.0
    %2096 = vmatpush2.msra.mxu0 0.0
    %2097 = vmatprep.mubr.f32.mxu0 0.0
    %2098 = vmatmul.mubr.f32.gmra.mxu0 %v2031
    %v2099 = vpop.f32.mrf.mxu0
    %v2100 = vadd.f32 0.0, %v2099
    %v2101 = vpop.f32.mrf.mxu0
    %v2102 = vadd.f32 0.0, %v2101
    %2103 = vdwg.mxu0
    %2104 = vmatprep.subr.mxu0 0.0
    %2105 = vmatpush1.msra.mxu0 0.0
    %2106 = vmatprep.subr.mxu0 0.0
    %2107 = vmatpush1.msra.mxu0 0.0
    %2108 = vmatprep.subr.mxu0 0.0
    %2109 = vmatpush1.msra.mxu0 0.0
    %2110 = vmatprep.subr.mxu0 0.0
    %2111 = vmatpush1.msra.mxu0 0.0
    %2112 = vmatprep.subr.mxu0 0.0
    %2113 = vmatpush1.msra.mxu0 0.0
    %2114 = vmatprep.subr.mxu0 0.0
    %2115 = vmatpush1.msra.mxu0 0.0
    %2116 = vmatprep.subr.mxu0 0.0
    %2117 = vmatpush1.msra.mxu0 0.0
    %2118 = vmatprep.subr.mxu0 0.0
    %2119 = vmatpush1.msra.mxu0 0.0
    %2120 = vmatprep.subr.mxu0 0.0
    %2121 = vmatpush1.msra.mxu0 0.0
    %2122 = vmatprep.subr.mxu0 0.0
    %2123 = vmatpush1.msra.mxu0 0.0
    %2124 = vmatprep.subr.mxu0 0.0
    %2125 = vmatpush1.msra.mxu0 0.0
    %2126 = vmatprep.subr.mxu0 0.0
    %2127 = vmatpush1.msra.mxu0 0.0
    %2128 = vmatprep.subr.mxu0 0.0
    %2129 = vmatpush1.msra.mxu0 %v79
    %2130 = vmatprep.subr.mxu0 0.0
    %2131 = vmatpush1.msra.mxu0 %v76
    %2132 = vmatprep.subr.mxu0 0.0
    %2133 = vmatpush1.msra.mxu0 %v73
    %2134 = vmatprep.subr.mxu0 0.0
    %2135 = vmatpush1.msra.mxu0 %v70
    %2136 = vmatprep.subr.mxu0 0.0
    %2137 = vmatpush2.msra.mxu0 0.0
    %2138 = vmatprep.subr.mxu0 0.0
    %2139 = vmatpush2.msra.mxu0 0.0
    %2140 = vmatprep.subr.mxu0 0.0
    %2141 = vmatpush2.msra.mxu0 0.0
    %2142 = vmatprep.subr.mxu0 0.0
    %2143 = vmatpush2.msra.mxu0 0.0
    %2144 = vmatprep.subr.mxu0 0.0
    %2145 = vmatpush2.msra.mxu0 0.0
    %2146 = vmatprep.subr.mxu0 0.0
    %2147 = vmatpush2.msra.mxu0 0.0
    %2148 = vmatprep.subr.mxu0 0.0
    %2149 = vmatpush2.msra.mxu0 0.0
    %2150 = vmatprep.subr.mxu0 0.0
    %2151 = vmatpush2.msra.mxu0 0.0
    %2152 = vmatprep.subr.mxu0 0.0
    %2153 = vmatpush2.msra.mxu0 0.0
    %2154 = vmatprep.subr.mxu0 0.0
    %2155 = vmatpush2.msra.mxu0 0.0
    %2156 = vmatprep.subr.mxu0 0.0
    %2157 = vmatpush2.msra.mxu0 0.0
    %2158 = vmatprep.subr.mxu0 0.0
    %2159 = vmatpush2.msra.mxu0 0.0
    %2160 = vmatprep.subr.mxu0 0.0
    %2161 = vmatpush2.msra.mxu0 0.0
    %2162 = vmatprep.subr.mxu0 0.0
    %2163 = vmatpush2.msra.mxu0 0.0
    %2164 = vmatprep.subr.mxu0 0.0
    %2165 = vmatpush2.msra.mxu0 0.0
    %2166 = vmatprep.subr.mxu0 0.0
    %2167 = vmatpush2.msra.mxu0 0.0
    %2168 = vmatprep.mubr.f32.mxu0 0.0
    %2169 = vmatmul.mubr.f32.gmra.mxu0 %v2031
    %v2170 = vpop.f32.mrf.mxu0
    %v2171 = vadd.f32 0.0, %v2170
    %v2172 = vpop.f32.mrf.mxu0
    %2173 = vdwg.mxu0
    %2174 = vmatprep.subr.mxu0 %v126
    %2175 = vmatpush1.msra.mxu0 %v125
    %2176 = vmatprep.subr.mxu0 %v123
    %2177 = vmatpush1.msra.mxu0 %v122
    %2178 = vmatprep.subr.mxu0 %v120
    %2179 = vmatpush1.msra.mxu0 %v119
    %2180 = vmatprep.subr.mxu0 %v117
    %2181 = vmatpush1.msra.mxu0 %v116
    %2182 = vmatprep.subr.mxu0 %v114
    %2183 = vmatpush1.msra.mxu0 %v113
    %2184 = vmatprep.subr.mxu0 %v111
    %2185 = vmatpush1.msra.mxu0 %v110
    %2186 = vmatprep.subr.mxu0 %v108
    %2187 = vmatpush1.msra.mxu0 %v107
    %2188 = vmatprep.subr.mxu0 %v105
    %2189 = vmatpush1.msra.mxu0 %v104
    %2190 = vmatprep.subr.mxu0 %v102
    %2191 = vmatpush1.msra.mxu0 %v101
    %2192 = vmatprep.subr.mxu0 %v99
    %2193 = vmatpush1.msra.mxu0 %v98
    %2194 = vmatprep.subr.mxu0 %v96
    %2195 = vmatpush1.msra.mxu0 %v95
    %2196 = vmatprep.subr.mxu0 %v93
    %2197 = vmatpush1.msra.mxu0 %v92
    %2198 = vmatprep.subr.mxu0 %v90
    %2199 = vmatpush1.msra.mxu0 %v89
    %2200 = vmatprep.subr.mxu0 %v87
    %2201 = vmatpush1.msra.mxu0 %v86
    %2202 = vmatprep.subr.mxu0 %v84
    %2203 = vmatpush1.msra.mxu0 %v83
    %2204 = vmatprep.subr.mxu0 %v81
    %2205 = vmatpush1.msra.mxu0 %v80
    %2206 = vmatprep.subr.mxu0 0.0
    %2207 = vmatpush2.msra.mxu0 0.0
    %2208 = vmatprep.subr.mxu0 0.0
    %2209 = vmatpush2.msra.mxu0 0.0
    %2210 = vmatprep.subr.mxu0 0.0
    %2211 = vmatpush2.msra.mxu0 0.0
    %2212 = vmatprep.subr.mxu0 0.0
    %2213 = vmatpush2.msra.mxu0 0.0
    %2214 = vmatprep.subr.mxu0 0.0
    %2215 = vmatpush2.msra.mxu0 0.0
    %2216 = vmatprep.subr.mxu0 0.0
    %2217 = vmatpush2.msra.mxu0 0.0
    %2218 = vmatprep.subr.mxu0 0.0
    %2219 = vmatpush2.msra.mxu0 0.0
    %2220 = vmatprep.subr.mxu0 0.0
    %2221 = vmatpush2.msra.mxu0 0.0
    %2222 = vmatprep.subr.mxu0 0.0
    %2223 = vmatpush2.msra.mxu0 0.0
    %2224 = vmatprep.subr.mxu0 0.0
    %2225 = vmatpush2.msra.mxu0 0.0
    %2226 = vmatprep.subr.mxu0 0.0
    %2227 = vmatpush2.msra.mxu0 0.0
    %2228 = vmatprep.subr.mxu0 0.0
    %2229 = vmatpush2.msra.mxu0 0.0
    %2230 = vmatprep.subr.mxu0 0.0
    %2231 = vmatpush2.msra.mxu0 0.0
    %2232 = vmatprep.subr.mxu0 0.0
    %2233 = vmatpush2.msra.mxu0 0.0
    %2234 = vmatprep.subr.mxu0 0.0
    %2235 = vmatpush2.msra.mxu0 0.0
    %2236 = vmatprep.subr.mxu0 0.0
    %2237 = vmatpush2.msra.mxu0 0.0
    %2238 = vmatprep.mubr.f32.mxu0 0.0
    %2239 = vmatmul.mubr.f32.gmra.mxu0 %v2027
    %v2240 = vpop.f32.mrf.mxu0
    %v2241 = vadd.f32 0.0, %v2240
    %v2242 = vpop.f32.mrf.mxu0
    %v2243 = vadd.f32 0.0, %v2242
    %2244 = vdwg.mxu0
    %2245 = vmatprep.subr.mxu0 0.0
    %2246 = vmatpush1.msra.mxu0 %v127
    %2247 = vmatprep.subr.mxu0 0.0
    %2248 = vmatpush1.msra.mxu0 %v124
    %2249 = vmatprep.subr.mxu0 0.0
    %2250 = vmatpush1.msra.mxu0 %v121
    %2251 = vmatprep.subr.mxu0 0.0
    %2252 = vmatpush1.msra.mxu0 %v118
    %2253 = vmatprep.subr.mxu0 0.0
    %2254 = vmatpush1.msra.mxu0 %v115
    %2255 = vmatprep.subr.mxu0 0.0
    %2256 = vmatpush1.msra.mxu0 %v112
    %2257 = vmatprep.subr.mxu0 0.0
    %2258 = vmatpush1.msra.mxu0 %v109
    %2259 = vmatprep.subr.mxu0 0.0
    %2260 = vmatpush1.msra.mxu0 %v106
    %2261 = vmatprep.subr.mxu0 0.0
    %2262 = vmatpush1.msra.mxu0 %v103
    %2263 = vmatprep.subr.mxu0 0.0
    %2264 = vmatpush1.msra.mxu0 %v100
    %2265 = vmatprep.subr.mxu0 0.0
    %2266 = vmatpush1.msra.mxu0 %v97
    %2267 = vmatprep.subr.mxu0 0.0
    %2268 = vmatpush1.msra.mxu0 %v94
    %2269 = vmatprep.subr.mxu0 0.0
    %2270 = vmatpush1.msra.mxu0 %v91
    %2271 = vmatprep.subr.mxu0 0.0
    %2272 = vmatpush1.msra.mxu0 %v88
    %2273 = vmatprep.subr.mxu0 0.0
    %2274 = vmatpush1.msra.mxu0 %v85
    %2275 = vmatprep.subr.mxu0 0.0
    %2276 = vmatpush1.msra.mxu0 %v82
    %2277 = vmatprep.subr.mxu0 0.0
    %2278 = vmatpush2.msra.mxu0 0.0
    %2279 = vmatprep.subr.mxu0 0.0
    %2280 = vmatpush2.msra.mxu0 0.0
    %2281 = vmatprep.subr.mxu0 0.0
    %2282 = vmatpush2.msra.mxu0 0.0
    %2283 = vmatprep.subr.mxu0 0.0
    %2284 = vmatpush2.msra.mxu0 0.0
    %2285 = vmatprep.subr.mxu0 0.0
    %2286 = vmatpush2.msra.mxu0 0.0
    %2287 = vmatprep.subr.mxu0 0.0
    %2288 = vmatpush2.msra.mxu0 0.0
    %2289 = vmatprep.subr.mxu0 0.0
    %2290 = vmatpush2.msra.mxu0 0.0
    %2291 = vmatprep.subr.mxu0 0.0
    %2292 = vmatpush2.msra.mxu0 0.0
    %2293 = vmatprep.subr.mxu0 0.0
    %2294 = vmatpush2.msra.mxu0 0.0
    %2295 = vmatprep.subr.mxu0 0.0
    %2296 = vmatpush2.msra.mxu0 0.0
    %2297 = vmatprep.subr.mxu0 0.0
    %2298 = vmatpush2.msra.mxu0 0.0
    %2299 = vmatprep.subr.mxu0 0.0
    %2300 = vmatpush2.msra.mxu0 0.0
    %2301 = vmatprep.subr.mxu0 0.0
    %2302 = vmatpush2.msra.mxu0 0.0
    %2303 = vmatprep.subr.mxu0 0.0
    %2304 = vmatpush2.msra.mxu0 0.0
    %2305 = vmatprep.subr.mxu0 0.0
    %2306 = vmatpush2.msra.mxu0 0.0
    %2307 = vmatprep.subr.mxu0 0.0
    %2308 = vmatpush2.msra.mxu0 0.0
    %2309 = vmatprep.mubr.f32.mxu0 0.0
    %2310 = vmatmul.mubr.f32.gmra.mxu0 %v2027
    %v2311 = vpop.f32.mrf.mxu0
    %v2312 = vadd.f32 0.0, %v2311
    %v2313 = vpop.f32.mrf.mxu0
    %2314 = vdwg.mxu0
    %v2315 = vadd.f32 %v2100, %v2241
    %v2316 = vadd.f32 %v2315, %v424
    %v2317 = vxor.u32 %v2316, 2147483648
    %v2318 = vmul.f32 %v2317, 1.442695
    %v2319 = vpow.pop %v2318
    %v2320 = vadd.f32 %v2319, 1.0
    %v2321 = vrcp.pop %v2320
    %v2322 = vmul.f32 1.0, %v2321
    %v2323 = vadd.f32 %v2102, %v2243
    %v2324 = vadd.f32 %v2323, %v438
    %v2325 = vxor.u32 %v2324, 2147483648
    %v2326 = vmul.f32 %v2325, 1.442695
    %v2327 = vpow.pop %v2326
    %v2328 = vadd.f32 %v2327, 1.0
    %v2329 = vrcp.pop %v2328
    %v2330 = vmul.f32 1.0, %v2329
    %v2331 = vadd.f32 %v2171, %v451
    %v2332 = vadd.f32 %v2312, %v458
    %v2333 = vmul.f32 %v2322, %v2332
    %v2334 = vadd.f32 %v2331, %v2333
    %v2335 = vtanh.pop %v2334
    %v2336 = vsub.f32 1.0, %v2330
    %v2337 = vmul.f32 %v2336, %v2335
    %v2338 = vmul.f32 %v2330, %v2027
    %v2339 = vadd.f32 %v2337, %v2338
    %s2340 = scalar_lea.vmem [#allocation2], 14
    %v2341 = vld [vmem:[%s2340] sm:$0x3]
    %v2343 = vsel %vm133, %v2341, 0
    %2345 = vmatprep.subr.mxu0 0.0
    %2346 = vmatpush1.msra.mxu0 0.0
    %2347 = vmatprep.subr.mxu0 0.0
    %2348 = vmatpush1.msra.mxu0 0.0
    %2349 = vmatprep.subr.mxu0 0.0
    %2350 = vmatpush1.msra.mxu0 0.0
    %2351 = vmatprep.subr.mxu0 0.0
    %2352 = vmatpush1.msra.mxu0 0.0
    %2353 = vmatprep.subr.mxu0 0.0
    %2354 = vmatpush1.msra.mxu0 0.0
    %2355 = vmatprep.subr.mxu0 0.0
    %2356 = vmatpush1.msra.mxu0 0.0
    %2357 = vmatprep.subr.mxu0 0.0
    %2358 = vmatpush1.msra.mxu0 0.0
    %2359 = vmatprep.subr.mxu0 0.0
    %2360 = vmatpush1.msra.mxu0 0.0
    %2361 = vmatprep.subr.mxu0 0.0
    %2362 = vmatpush1.msra.mxu0 0.0
    %2363 = vmatprep.subr.mxu0 0.0
    %2364 = vmatpush1.msra.mxu0 0.0
    %2365 = vmatprep.subr.mxu0 0.0
    %2366 = vmatpush1.msra.mxu0 0.0
    %2367 = vmatprep.subr.mxu0 0.0
    %2368 = vmatpush1.msra.mxu0 0.0
    %2369 = vmatprep.subr.mxu0 %v78
    %2370 = vmatpush1.msra.mxu0 %v77
    %2371 = vmatprep.subr.mxu0 %v75
    %2372 = vmatpush1.msra.mxu0 %v74
    %2373 = vmatprep.subr.mxu0 %v72
    %2374 = vmatpush1.msra.mxu0 %v71
    %2375 = vmatprep.subr.mxu0 %v69
    %2376 = vmatpush1.msra.mxu0 %v68
    %2377 = vmatprep.subr.mxu0 0.0
    %2378 = vmatpush2.msra.mxu0 0.0
    %2379 = vmatprep.subr.mxu0 0.0
    %2380 = vmatpush2.msra.mxu0 0.0
    %2381 = vmatprep.subr.mxu0 0.0
    %2382 = vmatpush2.msra.mxu0 0.0
    %2383 = vmatprep.subr.mxu0 0.0
    %2384 = vmatpush2.msra.mxu0 0.0
    %2385 = vmatprep.subr.mxu0 0.0
    %2386 = vmatpush2.msra.mxu0 0.0
    %2387 = vmatprep.subr.mxu0 0.0
    %2388 = vmatpush2.msra.mxu0 0.0
    %2389 = vmatprep.subr.mxu0 0.0
    %2390 = vmatpush2.msra.mxu0 0.0
    %2391 = vmatprep.subr.mxu0 0.0
    %2392 = vmatpush2.msra.mxu0 0.0
    %2393 = vmatprep.subr.mxu0 0.0
    %2394 = vmatpush2.msra.mxu0 0.0
    %2395 = vmatprep.subr.mxu0 0.0
    %2396 = vmatpush2.msra.mxu0 0.0
    %2397 = vmatprep.subr.mxu0 0.0
    %2398 = vmatpush2.msra.mxu0 0.0
    %2399 = vmatprep.subr.mxu0 0.0
    %2400 = vmatpush2.msra.mxu0 0.0
    %2401 = vmatprep.subr.mxu0 0.0
    %2402 = vmatpush2.msra.mxu0 0.0
    %2403 = vmatprep.subr.mxu0 0.0
    %2404 = vmatpush2.msra.mxu0 0.0
    %2405 = vmatprep.subr.mxu0 0.0
    %2406 = vmatpush2.msra.mxu0 0.0
    %2407 = vmatprep.subr.mxu0 0.0
    %2408 = vmatpush2.msra.mxu0 0.0
    %2409 = vmatprep.mubr.f32.mxu0 0.0
    %2410 = vmatmul.mubr.f32.gmra.mxu0 %v2343
    %v2411 = vpop.f32.mrf.mxu0
    %v2412 = vadd.f32 0.0, %v2411
    %v2413 = vpop.f32.mrf.mxu0
    %v2414 = vadd.f32 0.0, %v2413
    %2415 = vdwg.mxu0
    %2416 = vmatprep.subr.mxu0 0.0
    %2417 = vmatpush1.msra.mxu0 0.0
    %2418 = vmatprep.subr.mxu0 0.0
    %2419 = vmatpush1.msra.mxu0 0.0
    %2420 = vmatprep.subr.mxu0 0.0
    %2421 = vmatpush1.msra.mxu0 0.0
    %2422 = vmatprep.subr.mxu0 0.0
    %2423 = vmatpush1.msra.mxu0 0.0
    %2424 = vmatprep.subr.mxu0 0.0
    %2425 = vmatpush1.msra.mxu0 0.0
    %2426 = vmatprep.subr.mxu0 0.0
    %2427 = vmatpush1.msra.mxu0 0.0
    %2428 = vmatprep.subr.mxu0 0.0
    %2429 = vmatpush1.msra.mxu0 0.0
    %2430 = vmatprep.subr.mxu0 0.0
    %2431 = vmatpush1.msra.mxu0 0.0
    %2432 = vmatprep.subr.mxu0 0.0
    %2433 = vmatpush1.msra.mxu0 0.0
    %2434 = vmatprep.subr.mxu0 0.0
    %2435 = vmatpush1.msra.mxu0 0.0
    %2436 = vmatprep.subr.mxu0 0.0
    %2437 = vmatpush1.msra.mxu0 0.0
    %2438 = vmatprep.subr.mxu0 0.0
    %2439 = vmatpush1.msra.mxu0 0.0
    %2440 = vmatprep.subr.mxu0 0.0
    %2441 = vmatpush1.msra.mxu0 %v79
    %2442 = vmatprep.subr.mxu0 0.0
    %2443 = vmatpush1.msra.mxu0 %v76
    %2444 = vmatprep.subr.mxu0 0.0
    %2445 = vmatpush1.msra.mxu0 %v73
    %2446 = vmatprep.subr.mxu0 0.0
    %2447 = vmatpush1.msra.mxu0 %v70
    %2448 = vmatprep.subr.mxu0 0.0
    %2449 = vmatpush2.msra.mxu0 0.0
    %2450 = vmatprep.subr.mxu0 0.0
    %2451 = vmatpush2.msra.mxu0 0.0
    %2452 = vmatprep.subr.mxu0 0.0
    %2453 = vmatpush2.msra.mxu0 0.0
    %2454 = vmatprep.subr.mxu0 0.0
    %2455 = vmatpush2.msra.mxu0 0.0
    %2456 = vmatprep.subr.mxu0 0.0
    %2457 = vmatpush2.msra.mxu0 0.0
    %2458 = vmatprep.subr.mxu0 0.0
    %2459 = vmatpush2.msra.mxu0 0.0
    %2460 = vmatprep.subr.mxu0 0.0
    %2461 = vmatpush2.msra.mxu0 0.0
    %2462 = vmatprep.subr.mxu0 0.0
    %2463 = vmatpush2.msra.mxu0 0.0
    %2464 = vmatprep.subr.mxu0 0.0
    %2465 = vmatpush2.msra.mxu0 0.0
    %2466 = vmatprep.subr.mxu0 0.0
    %2467 = vmatpush2.msra.mxu0 0.0
    %2468 = vmatprep.subr.mxu0 0.0
    %2469 = vmatpush2.msra.mxu0 0.0
    %2470 = vmatprep.subr.mxu0 0.0
    %2471 = vmatpush2.msra.mxu0 0.0
    %2472 = vmatprep.subr.mxu0 0.0
    %2473 = vmatpush2.msra.mxu0 0.0
    %2474 = vmatprep.subr.mxu0 0.0
    %2475 = vmatpush2.msra.mxu0 0.0
    %2476 = vmatprep.subr.mxu0 0.0
    %2477 = vmatpush2.msra.mxu0 0.0
    %2478 = vmatprep.subr.mxu0 0.0
    %2479 = vmatpush2.msra.mxu0 0.0
    %2480 = vmatprep.mubr.f32.mxu0 0.0
    %2481 = vmatmul.mubr.f32.gmra.mxu0 %v2343
    %v2482 = vpop.f32.mrf.mxu0
    %v2483 = vadd.f32 0.0, %v2482
    %v2484 = vpop.f32.mrf.mxu0
    %2485 = vdwg.mxu0
    %2486 = vmatprep.subr.mxu0 %v126
    %2487 = vmatpush1.msra.mxu0 %v125
    %2488 = vmatprep.subr.mxu0 %v123
    %2489 = vmatpush1.msra.mxu0 %v122
    %2490 = vmatprep.subr.mxu0 %v120
    %2491 = vmatpush1.msra.mxu0 %v119
    %2492 = vmatprep.subr.mxu0 %v117
    %2493 = vmatpush1.msra.mxu0 %v116
    %2494 = vmatprep.subr.mxu0 %v114
    %2495 = vmatpush1.msra.mxu0 %v113
    %2496 = vmatprep.subr.mxu0 %v111
    %2497 = vmatpush1.msra.mxu0 %v110
    %2498 = vmatprep.subr.mxu0 %v108
    %2499 = vmatpush1.msra.mxu0 %v107
    %2500 = vmatprep.subr.mxu0 %v105
    %2501 = vmatpush1.msra.mxu0 %v104
    %2502 = vmatprep.subr.mxu0 %v102
    %2503 = vmatpush1.msra.mxu0 %v101
    %2504 = vmatprep.subr.mxu0 %v99
    %2505 = vmatpush1.msra.mxu0 %v98
    %2506 = vmatprep.subr.mxu0 %v96
    %2507 = vmatpush1.msra.mxu0 %v95
    %2508 = vmatprep.subr.mxu0 %v93
    %2509 = vmatpush1.msra.mxu0 %v92
    %2510 = vmatprep.subr.mxu0 %v90
    %2511 = vmatpush1.msra.mxu0 %v89
    %2512 = vmatprep.subr.mxu0 %v87
    %2513 = vmatpush1.msra.mxu0 %v86
    %2514 = vmatprep.subr.mxu0 %v84
    %2515 = vmatpush1.msra.mxu0 %v83
    %2516 = vmatprep.subr.mxu0 %v81
    %2517 = vmatpush1.msra.mxu0 %v80
    %2518 = vmatprep.subr.mxu0 0.0
    %2519 = vmatpush2.msra.mxu0 0.0
    %2520 = vmatprep.subr.mxu0 0.0
    %2521 = vmatpush2.msra.mxu0 0.0
    %2522 = vmatprep.subr.mxu0 0.0
    %2523 = vmatpush2.msra.mxu0 0.0
    %2524 = vmatprep.subr.mxu0 0.0
    %2525 = vmatpush2.msra.mxu0 0.0
    %2526 = vmatprep.subr.mxu0 0.0
    %2527 = vmatpush2.msra.mxu0 0.0
    %2528 = vmatprep.subr.mxu0 0.0
    %2529 = vmatpush2.msra.mxu0 0.0
    %2530 = vmatprep.subr.mxu0 0.0
    %2531 = vmatpush2.msra.mxu0 0.0
    %2532 = vmatprep.subr.mxu0 0.0
    %2533 = vmatpush2.msra.mxu0 0.0
    %2534 = vmatprep.subr.mxu0 0.0
    %2535 = vmatpush2.msra.mxu0 0.0
    %2536 = vmatprep.subr.mxu0 0.0
    %2537 = vmatpush2.msra.mxu0 0.0
    %2538 = vmatprep.subr.mxu0 0.0
    %2539 = vmatpush2.msra.mxu0 0.0
    %2540 = vmatprep.subr.mxu0 0.0
    %2541 = vmatpush2.msra.mxu0 0.0
    %2542 = vmatprep.subr.mxu0 0.0
    %2543 = vmatpush2.msra.mxu0 0.0
    %2544 = vmatprep.subr.mxu0 0.0
    %2545 = vmatpush2.msra.mxu0 0.0
    %2546 = vmatprep.subr.mxu0 0.0
    %2547 = vmatpush2.msra.mxu0 0.0
    %2548 = vmatprep.subr.mxu0 0.0
    %2549 = vmatpush2.msra.mxu0 0.0
    %2550 = vmatprep.mubr.f32.mxu0 0.0
    %2551 = vmatmul.mubr.f32.gmra.mxu0 %v2339
    %v2552 = vpop.f32.mrf.mxu0
    %v2553 = vadd.f32 0.0, %v2552
    %v2554 = vpop.f32.mrf.mxu0
    %v2555 = vadd.f32 0.0, %v2554
    %2556 = vdwg.mxu0
    %2557 = vmatprep.subr.mxu0 0.0
    %2558 = vmatpush1.msra.mxu0 %v127
    %2559 = vmatprep.subr.mxu0 0.0
    %2560 = vmatpush1.msra.mxu0 %v124
    %2561 = vmatprep.subr.mxu0 0.0
    %2562 = vmatpush1.msra.mxu0 %v121
    %2563 = vmatprep.subr.mxu0 0.0
    %2564 = vmatpush1.msra.mxu0 %v118
    %2565 = vmatprep.subr.mxu0 0.0
    %2566 = vmatpush1.msra.mxu0 %v115
    %2567 = vmatprep.subr.mxu0 0.0
    %2568 = vmatpush1.msra.mxu0 %v112
    %2569 = vmatprep.subr.mxu0 0.0
    %2570 = vmatpush1.msra.mxu0 %v109
    %2571 = vmatprep.subr.mxu0 0.0
    %2572 = vmatpush1.msra.mxu0 %v106
    %2573 = vmatprep.subr.mxu0 0.0
    %2574 = vmatpush1.msra.mxu0 %v103
    %2575 = vmatprep.subr.mxu0 0.0
    %2576 = vmatpush1.msra.mxu0 %v100
    %2577 = vmatprep.subr.mxu0 0.0
    %2578 = vmatpush1.msra.mxu0 %v97
    %2579 = vmatprep.subr.mxu0 0.0
    %2580 = vmatpush1.msra.mxu0 %v94
    %2581 = vmatprep.subr.mxu0 0.0
    %2582 = vmatpush1.msra.mxu0 %v91
    %2583 = vmatprep.subr.mxu0 0.0
    %2584 = vmatpush1.msra.mxu0 %v88
    %2585 = vmatprep.subr.mxu0 0.0
    %2586 = vmatpush1.msra.mxu0 %v85
    %2587 = vmatprep.subr.mxu0 0.0
    %2588 = vmatpush1.msra.mxu0 %v82
    %2589 = vmatprep.subr.mxu0 0.0
    %2590 = vmatpush2.msra.mxu0 0.0
    %2591 = vmatprep.subr.mxu0 0.0
    %2592 = vmatpush2.msra.mxu0 0.0
    %2593 = vmatprep.subr.mxu0 0.0
    %2594 = vmatpush2.msra.mxu0 0.0
    %2595 = vmatprep.subr.mxu0 0.0
    %2596 = vmatpush2.msra.mxu0 0.0
    %2597 = vmatprep.subr.mxu0 0.0
    %2598 = vmatpush2.msra.mxu0 0.0
    %2599 = vmatprep.subr.mxu0 0.0
    %2600 = vmatpush2.msra.mxu0 0.0
    %2601 = vmatprep.subr.mxu0 0.0
    %2602 = vmatpush2.msra.mxu0 0.0
    %2603 = vmatprep.subr.mxu0 0.0
    %2604 = vmatpush2.msra.mxu0 0.0
    %2605 = vmatprep.subr.mxu0 0.0
    %2606 = vmatpush2.msra.mxu0 0.0
    %2607 = vmatprep.subr.mxu0 0.0
    %2608 = vmatpush2.msra.mxu0 0.0
    %2609 = vmatprep.subr.mxu0 0.0
    %2610 = vmatpush2.msra.mxu0 0.0
    %2611 = vmatprep.subr.mxu0 0.0
    %2612 = vmatpush2.msra.mxu0 0.0
    %2613 = vmatprep.subr.mxu0 0.0
    %2614 = vmatpush2.msra.mxu0 0.0
    %2615 = vmatprep.subr.mxu0 0.0
    %2616 = vmatpush2.msra.mxu0 0.0
    %2617 = vmatprep.subr.mxu0 0.0
    %2618 = vmatpush2.msra.mxu0 0.0
    %2619 = vmatprep.subr.mxu0 0.0
    %2620 = vmatpush2.msra.mxu0 0.0
    %2621 = vmatprep.mubr.f32.mxu0 0.0
    %2622 = vmatmul.mubr.f32.gmra.mxu0 %v2339
    %v2623 = vpop.f32.mrf.mxu0
    %v2624 = vadd.f32 0.0, %v2623
    %v2625 = vpop.f32.mrf.mxu0
    %2626 = vdwg.mxu0
    %v2627 = vadd.f32 %v2412, %v2553
    %v2628 = vadd.f32 %v2627, %v424
    %v2629 = vxor.u32 %v2628, 2147483648
    %v2630 = vmul.f32 %v2629, 1.442695
    %v2631 = vpow.pop %v2630
    %v2632 = vadd.f32 %v2631, 1.0
    %v2633 = vrcp.pop %v2632
    %v2634 = vmul.f32 1.0, %v2633
    %v2635 = vadd.f32 %v2414, %v2555
    %v2636 = vadd.f32 %v2635, %v438
    %v2637 = vxor.u32 %v2636, 2147483648
    %v2638 = vmul.f32 %v2637, 1.442695
    %v2639 = vpow.pop %v2638
    %v2640 = vadd.f32 %v2639, 1.0
    %v2641 = vrcp.pop %v2640
    %v2642 = vmul.f32 1.0, %v2641
    %v2643 = vadd.f32 %v2483, %v451
    %v2644 = vadd.f32 %v2624, %v458
    %v2645 = vmul.f32 %v2634, %v2644
    %v2646 = vadd.f32 %v2643, %v2645
    %v2647 = vtanh.pop %v2646
    %v2648 = vsub.f32 1.0, %v2642
    %v2649 = vmul.f32 %v2648, %v2647
    %v2650 = vmul.f32 %v2642, %v2339
    %v2651 = vadd.f32 %v2649, %v2650
    %2652 = vst [vmem:[#allocation8] sm:$0x3] %v2651
    // Predicated region
    $region42: #{tpu_custom_call.1} parent=1 // pred_check
      _
    $region43: #{tpu_custom_call.1} parent=1 // pred_check_branch
      %2654 = sbr.rel (0) target = $region45
    $region44: #{tpu_custom_call.1} parent=1 // pred_region
      %s2656 = ssub.s32 32, 32
      %2657 = vsyncadd [#allocation4], %s2656
      %s2659 = sshll.u32 [#allocation8], 4
      %s2660 = int_to_ptr.vmem [resolvable:$true] %s2659
      %2662 = dma.vmem_to_hbm [thread:$0]  %s2660, 32, %s7, [#allocation4]
    $region45: #{tpu_custom_call.1} parent=1 // pred_fallthru
      _
    // Predicated region
    $region46: #{tpu_custom_call.1} parent=1 // pred_check
      _
    $region47: #{tpu_custom_call.1} parent=1 // pred_check_branch
      %2664 = sbr.rel (0) target = $region49
    $region48: #{tpu_custom_call.1} parent=1 // pred_region
      %2665 = dma.done [#allocation4], 32
    $region49: #{tpu_custom_call.1} parent=1 // pred_fallthru
      _
    %2666 = vsyncpa [#allocation3], 1
    %2667 = vsyncpa [#allocation6], 1
    %2668 = vsyncpa [#allocation4], 1

</llo_original>
